<compile_context>
chip_gen: v7x
topology: tpu7x:2x2x1
jax: 0.10.0
libtpu: 0.0.40
codegen_flags: <defaults>
</compile_context>

<pallas_src>
import numpy as np
import jax
import jax.numpy as jnp
from jax.experimental import pallas as pl
from jax.experimental.pallas import tpu as pltpu


def dipole_kernel(xin_ref, lmask_ref,
                  wemb_ref, bemb_ref,
                  wih_ref, bih_ref,
                  whh_ref, bhh_ref,
                  wloc_ref, bloc_ref,
                  wfc1_ref, wfc2_ref, bfc2_ref,
                  out_ref,
                  hs_ref):
    f32 = jnp.float32
    B = out_ref.shape[0]
    E2 = wloc_ref.shape[0]        # 2*E   (fwd | rev halves along lanes)
    E4 = 2 * E2                   # 4*E
    VB = xin_ref.shape[0]         # V * B (time-major rows, row = t*B + b)
    V = VB // B

    # ---- fused visit embedding (fwd | rev along lanes): one (VB,2C)@(2C,2E) ----
    emb = jnp.dot(xin_ref[...], wemb_ref[...], preferred_element_type=f32) + bemb_ref[...]
    emb = jnp.maximum(emb, 0.0)                                   # (VB, 2E)

    # ---- hoisted input-gate matmul for BOTH directions at once ----
    # gate-interleaved column layout: [r_f | r_r | z_f | z_r | n_f | n_r]
    gi = jnp.dot(emb, wih_ref[...], preferred_element_type=f32) + bih_ref[...]   # (VB, 6E)

    whh = whh_ref[...]
    bhh = bhh_ref[...]

    # ---- interleaved fwd+rev GRU recurrence, batched over B, unrolled over V ----
    # per step: one matmul, one sigmoid over the lane-aligned 4E r|z slab,
    # one tanh over 2E, and one (B,2E) slab store.
    h = jnp.zeros((B, E2), f32)                                   # [h_fwd | h_rev]
    for t in range(V):
        lo = t * B
        gh = jnp.dot(h, whh, preferred_element_type=f32) + bhh    # (B, 6E)
        gi_t = gi[lo:lo + B, :]
        rz = jax.nn.sigmoid(gi_t[:, :E4] + gh[:, :E4])            # (B, 4E) = [r | z]
        r = rz[:, :E2]
        z = rz[:, E2:]
        n = jnp.tanh(gi_t[:, E4:] + r * gh[:, E4:])               # (B, 2E) = [n_f | n_r]
        h = (1.0 - z) * n + z * h
        hs_ref[lo:lo + B, :] = h                                  # single slab store

    # ---- `local` linear over all states of both directions: one (VB,2E)@(2E,2E) ----
    hs = hs_ref[...]                                              # (VB, 2E)
    y = jnp.dot(hs, wloc_ref[...], preferred_element_type=f32) + bloc_ref[...]

    # ---- softmax over visits + last-visit selection, vectorized over batch & dir ----
    lm = lmask_ref[...]                                           # (VB, 2E) one-hot over t
    mx = y[0:B, :]
    for t in range(1, V):
        mx = jnp.maximum(mx, y[t * B:(t + 1) * B, :])
    e = jnp.exp(y - jnp.concatenate([mx] * V, axis=0))            # ONE exp over (VB, 2E)
    em = e * lm
    hm = hs * lm
    den = e[0:B, :]
    num = em[0:B, :]
    th = hm[0:B, :]
    for t in range(1, V):
        sl = slice(t * B, (t + 1) * B)
        den = den + e[sl, :]
        num = num + em[sl, :]
        th = th + hm[sl, :]
    o_cat = num / den                                             # (B, 2E) = [o | ro]

    # ---- fc1 as ONE (B,4E)@(4E,E) matmul, tanh, fc2, sigmoid ----
    cat = jnp.concatenate([o_cat, th], axis=1)                    # (B,4E)=[o|ro|h|h_rev]
    h1 = jnp.tanh(jnp.dot(cat, wfc1_ref[...], preferred_element_type=f32))
    logits = jnp.dot(h1, wfc2_ref[...], preferred_element_type=f32) + bfc2_ref[...]
    out_ref[...] = jax.nn.sigmoid(logits)


def dipole_forward(x, masks, rev_x, rev_masks, params):
    B, V, C = x.shape
    E = params["wemb"].shape[1]
    ncat = params["wfc2"].shape[1]
    f32 = jnp.float32

    # -------- wrapper-side layout plumbing (one-time repack) --------
    # time-major rows (row = t*B + b), fwd | rev stacked along LANES
    x_tm = jnp.transpose(x, (1, 0, 2)).reshape(V * B, C)
    rx_tm = jnp.transpose(rev_x, (1, 0, 2)).reshape(V * B, C)
    xin = jnp.concatenate([x_tm, rx_tm], axis=1).astype(f32)            # (VB, 2C)

    def last_onehot(m):                                  # get_last_visit index -> one-hot
        valid = (jnp.sum(m, axis=2) > 0).astype(jnp.int32)              # (B, V)
        last = jnp.sum(valid, axis=1) - 1
        return jax.nn.one_hot(last, V, dtype=f32)                       # (B, V)

    oh_f = last_onehot(masks).T.reshape(V * B, 1)        # row t*B + b
    oh_r = last_onehot(rev_masks).T.reshape(V * B, 1)
    lmask = jnp.concatenate([jnp.broadcast_to(oh_f, (V * B, E)),
                             jnp.broadcast_to(oh_r, (V * B, E))], axis=1)  # (VB, 2E)

    def block2(a, b_):
        """block-diagonal [[a, 0], [0, b]]"""
        ra, ca = a.shape
        rb, cb = b_.shape
        out = jnp.zeros((ra + rb, ca + cb), f32)
        return out.at[:ra, :ca].set(a).at[ra:, ca:].set(b_)

    def gate_interleave_w(wf, wr):
        """(E,3E) fwd + (E,3E) rev -> (2E,6E) with columns [r_f|r_r|z_f|z_r|n_f|n_r]."""
        out = jnp.zeros((2 * E, 6 * E), f32)
        for g in range(3):
            out = out.at[:E, (2 * g) * E:(2 * g + 1) * E].set(wf[:, g * E:(g + 1) * E])
            out = out.at[E:, (2 * g + 1) * E:(2 * g + 2) * E].set(wr[:, g * E:(g + 1) * E])
        return out

    def gate_interleave_b(bf, br):
        return jnp.concatenate([bf[:, :E], br[:, :E],
                                bf[:, E:2 * E], br[:, E:2 * E],
                                bf[:, 2 * E:], br[:, 2 * E:]], axis=1)

    wemb2 = block2(params["wemb"], params["wemb"])                       # (2C, 2E)
    bemb2 = jnp.concatenate([params["bemb"], params["bemb"]], axis=1)    # (1, 2E)
    wih2 = gate_interleave_w(params["wih"], params["rwih"])              # (2E, 6E)
    bih2 = gate_interleave_b(params["bih"], params["rbih"])              # (1, 6E)
    whh2 = gate_interleave_w(params["whh"], params["rwhh"])              # (2E, 6E)
    bhh2 = gate_interleave_b(params["bhh"], params["rbhh"])              # (1, 6E)
    wloc2 = block2(params["wloc"], params["wloc"])                       # (2E, 2E)
    bloc2 = jnp.concatenate([params["bloc"], params["bloc"]], axis=1)    # (1, 2E)

    inputs = (xin, lmask, wemb2, bemb2, wih2, bih2, whh2, bhh2,
              wloc2, bloc2,
              params["wfc1"].astype(f32), params["wfc2"].astype(f32),
              params["bfc2"].astype(f32))

    vmem = pl.BlockSpec(memory_space=pltpu.MemorySpace.VMEM)

    flops = 2 * (V * B * 2 * C * 2 * E        # embedding
                 + V * B * 2 * E * 6 * E      # hoisted input gates
                 + V * B * 2 * E * 6 * E      # per-step hidden matmuls (total)
                 + V * B * 2 * E * 2 * E      # local linear
                 + B * 4 * E * E              # fc1
                 + B * E * ncat)              # fc2
    trans = V * B * 6 * E + V * B * 2 * E + B * E + B * ncat
    bytes_acc = 4 * (sum(int(np.prod(a.shape)) for a in inputs) + B * ncat)
    cost = pl.CostEstimate(flops=int(flops), transcendentals=int(trans),
                           bytes_accessed=int(bytes_acc))

    return pl.pallas_call(
        dipole_kernel,
        out_shape=jax.ShapeDtypeStruct((B, ncat), jnp.float32),
        in_specs=[vmem] * len(inputs),
        out_specs=vmem,
        scratch_shapes=[pltpu.VMEM((V * B, 2 * E), jnp.float32)],   # GRU states [fwd|rev]
        cost_estimate=cost,
    )(*inputs)


def init_params(key, C, E, ncat):
    ks = jax.random.split(key, 15)

    def u(k, shape, fan_in):
        bound = 1.0 / np.sqrt(fan_in)
        return jax.random.uniform(k, shape, jnp.float32, -bound, bound)

    return dict(
        wemb=u(ks[0], (C, E), C), bemb=u(ks[1], (1, E), C),          # visit_emb
        wih=u(ks[2], (E, 3 * E), E), whh=u(ks[3], (E, 3 * E), E),    # rnn
        bih=u(ks[4], (1, 3 * E), E), bhh=u(ks[5], (1, 3 * E), E),
        rwih=u(ks[6], (E, 3 * E), E), rwhh=u(ks[7], (E, 3 * E), E),  # rev_rnn
        rbih=u(ks[8], (1, 3 * E), E), rbhh=u(ks[9], (1, 3 * E), E),
        wloc=u(ks[10], (E, E), E), bloc=u(ks[11], (1, E), E),        # local
        wfc1=u(ks[12], (4 * E, E), 4 * E),                           # fc1 (no bias)
        wfc2=u(ks[13], (E, ncat), E), bfc2=u(ks[14], (1, ncat), E),  # fc2
    )


def dipole_reference(x, masks, rev_x, rev_masks, p):
    """Pure-JAX reference mirroring the PyTorch module semantics."""
    E = p["wemb"].shape[1]

    def embed(xin):
        return jax.nn.relu(jnp.einsum("bvc,ce->bve", xin, p["wemb"]) + p["bemb"][None])

    def gru(xemb, wih, whh, bih, bhh):
        B = xemb.shape[0]

        def step(h, xt):
            gi = xt @ wih + bih
            gh = h @ whh + bhh
            r = jax.nn.sigmoid(gi[:, :E] + gh[:, :E])
            z = jax.nn.sigmoid(gi[:, E:2 * E] + gh[:, E:2 * E])
            n = jnp.tanh(gi[:, 2 * E:] + r * gh[:, 2 * E:])
            h = (1.0 - z) * n + z * h
            return h, h

        _, hs = jax.lax.scan(step, jnp.zeros((B, E), jnp.float32),
                             jnp.swapaxes(xemb, 0, 1))
        return jnp.swapaxes(hs, 0, 1)

    def last_visit(states, m):
        valid = (jnp.sum(m, 2) > 0).astype(jnp.float32)
        last = jnp.sum(valid, 1).astype(jnp.int32) - 1
        onehot = jax.nn.one_hot(last, states.shape[1], dtype=states.dtype)
        return jnp.sum(states * onehot[:, :, None], 1)

    xemb, rxemb = embed(x), embed(rev_x)
    hs = gru(xemb, p["wih"], p["whh"], p["bih"], p["bhh"])
    rhs = gru(rxemb, p["rwih"], p["rwhh"], p["rbih"], p["rbhh"])
    true_h, true_h_rev = last_visit(hs, masks), last_visit(rhs, rev_masks)
    loc = jax.nn.softmax(jnp.einsum("bve,ef->bvf", hs, p["wloc"]) + p["bloc"][None], axis=1)
    rloc = jax.nn.softmax(jnp.einsum("bve,ef->bvf", rhs, p["wloc"]) + p["bloc"][None], axis=1)
    o, ro = last_visit(loc, masks), last_visit(rloc, rev_masks)
    cat = jnp.concatenate([o, ro, true_h, true_h_rev], axis=1)
    h1 = jnp.tanh(cat @ p["wfc1"])
    return jax.nn.sigmoid(h1 @ p["wfc2"] + p["bfc2"])


if __name__ == "__main__":
    B, V, C, E, NCAT = 2, 8, 16, 32, 4   # batch, visits, max_num_codes, emb_dim, num_categories

    key = jax.random.PRNGKey(0)
    kp, kx = jax.random.split(key)
    params = init_params(kp, C, E, NCAT)

    # Deterministic inputs: binary code indicators, per-patient visit lengths.
    lengths = [5, 7]
    codes = np.asarray((jax.random.uniform(kx, (B, V, C)) > 0.5).astype(jnp.float32))
    m_np = np.zeros((B, V, C), np.float32)
    for b, L in enumerate(lengths):
        m_np[b, :L, :] = 1.0
    x_np = codes * m_np
    rev_x_np = np.zeros_like(x_np)
    rev_m_np = np.zeros_like(m_np)
    for b, L in enumerate(lengths):
        rev_x_np[b, :L] = x_np[b, :L][::-1]
        rev_m_np[b, :L] = m_np[b, :L][::-1]

    x = jnp.asarray(x_np)
    masks = jnp.asarray(m_np)
    rev_x = jnp.asarray(rev_x_np)
    rev_masks = jnp.asarray(rev_m_np)

    out = dipole_forward(x, masks, rev_x, rev_masks, params)
    out = jax.block_until_ready(out)

    ref = dipole_reference(x, masks, rev_x, rev_masks, params)
    np.testing.assert_allclose(np.asarray(out), np.asarray(ref), rtol=2e-3, atol=2e-3)
    assert out.shape == (B, NCAT)

    print("KERNEL_OK")
</pallas_src>

<mosaic_0001>
module attributes {stable_mosaic.version = 11 : i64} {
  func.func @dipole_kernel(%arg0: memref<16x32xf32, #tpu.memory_space<vmem>>, %arg1: memref<16x64xf32, #tpu.memory_space<vmem>>, %arg2: memref<32x64xf32, #tpu.memory_space<vmem>>, %arg3: memref<1x64xf32, #tpu.memory_space<vmem>>, %arg4: memref<64x192xf32, #tpu.memory_space<vmem>>, %arg5: memref<1x192xf32, #tpu.memory_space<vmem>>, %arg6: memref<64x192xf32, #tpu.memory_space<vmem>>, %arg7: memref<1x192xf32, #tpu.memory_space<vmem>>, %arg8: memref<64x64xf32, #tpu.memory_space<vmem>>, %arg9: memref<1x64xf32, #tpu.memory_space<vmem>>, %arg10: memref<128x32xf32, #tpu.memory_space<vmem>>, %arg11: memref<32x4xf32, #tpu.memory_space<vmem>>, %arg12: memref<1x4xf32, #tpu.memory_space<vmem>>, %arg13: memref<2x4xf32, #tpu.memory_space<vmem>>, %arg14: memref<16x64xf32, #tpu.memory_space<vmem>>) attributes {dimension_semantics = [], scalar_prefetch = 0 : i64, scratch_operands = 1 : i64, tpu.core_type = #tpu.core_type<tc>} {
    %c0 = arith.constant 0 : index
    %c0_0 = arith.constant 0 : index
    %0 = vector.load %arg0[%c0, %c0_0] : memref<16x32xf32, #tpu.memory_space<vmem>>, vector<16x32xf32>
    %c0_1 = arith.constant 0 : index
    %c0_2 = arith.constant 0 : index
    %1 = vector.load %arg2[%c0_1, %c0_2] : memref<32x64xf32, #tpu.memory_space<vmem>>, vector<32x64xf32>
    %cst = arith.constant dense<0.000000e+00> : vector<16x64xf32>
    %2 = tpu.matmul %0, %1, %cst {dimension_numbers = #tpu.dot_dimension_numbers<[1], [0], [0], [1], [0, 0, 1, 1], [], []>} : vector<16x32xf32>, vector<32x64xf32>, vector<16x64xf32> -> vector<16x64xf32>
    %c0_3 = arith.constant 0 : index
    %c0_4 = arith.constant 0 : index
    %3 = vector.load %arg3[%c0_3, %c0_4] : memref<1x64xf32, #tpu.memory_space<vmem>>, vector<1x64xf32>
    %4 = vector.broadcast %3 : vector<1x64xf32> to vector<16x64xf32>
    %5 = arith.addf %2, %4 : vector<16x64xf32>
    %cst_5 = arith.constant 0.000000e+00 : f32
    %6 = vector.broadcast %cst_5 : f32 to vector<16x64xf32>
    %7 = arith.maximumf %5, %6 : vector<16x64xf32>
    %c0_6 = arith.constant 0 : index
    %c0_7 = arith.constant 0 : index
    %8 = vector.load %arg4[%c0_6, %c0_7] : memref<64x192xf32, #tpu.memory_space<vmem>>, vector<64x192xf32>
    %cst_8 = arith.constant dense<0.000000e+00> : vector<16x192xf32>
    %9 = tpu.matmul %7, %8, %cst_8 {dimension_numbers = #tpu.dot_dimension_numbers<[1], [0], [0], [1], [0, 0, 1, 1], [], []>} : vector<16x64xf32>, vector<64x192xf32>, vector<16x192xf32> -> vector<16x192xf32>
    %c0_9 = arith.constant 0 : index
    %c0_10 = arith.constant 0 : index
    %10 = vector.load %arg5[%c0_9, %c0_10] : memref<1x192xf32, #tpu.memory_space<vmem>>, vector<1x192xf32>
    %11 = vector.broadcast %10 : vector<1x192xf32> to vector<16x192xf32>
    %12 = arith.addf %9, %11 : vector<16x192xf32>
    %c0_11 = arith.constant 0 : index
    %c0_12 = arith.constant 0 : index
    %13 = vector.load %arg6[%c0_11, %c0_12] : memref<64x192xf32, #tpu.memory_space<vmem>>, vector<64x192xf32>
    %c0_13 = arith.constant 0 : index
    %c0_14 = arith.constant 0 : index
    %14 = vector.load %arg7[%c0_13, %c0_14] : memref<1x192xf32, #tpu.memory_space<vmem>>, vector<1x192xf32>
    %cst_15 = arith.constant 0.000000e+00 : f32
    %15 = vector.broadcast %cst_15 : f32 to vector<2x64xf32>
    %cst_16 = arith.constant dense<0.000000e+00> : vector<2x192xf32>
    %16 = tpu.matmul %15, %13, %cst_16 {dimension_numbers = #tpu.dot_dimension_numbers<[1], [0], [0], [1], [0, 0, 1, 1], [], []>} : vector<2x64xf32>, vector<64x192xf32>, vector<2x192xf32> -> vector<2x192xf32>
    %17 = vector.broadcast %14 : vector<1x192xf32> to vector<2x192xf32>
    %18 = arith.addf %16, %17 : vector<2x192xf32>
    %19 = vector.extract_strided_slice %12 {offsets = [0, 0], sizes = [2, 192], strides = [1, 1]} : vector<16x192xf32> to vector<2x192xf32>
    %20 = vector.extract_strided_slice %19 {offsets = [0, 0], sizes = [2, 128], strides = [1, 1]} : vector<2x192xf32> to vector<2x128xf32>
    %21 = vector.extract_strided_slice %18 {offsets = [0, 0], sizes = [2, 128], strides = [1, 1]} : vector<2x192xf32> to vector<2x128xf32>
    %22 = arith.addf %20, %21 : vector<2x128xf32>
    %23 = arith.negf %22 : vector<2x128xf32>
    %24 = math.exp %23 : vector<2x128xf32>
    %cst_17 = arith.constant 1.000000e+00 : f32
    %25 = vector.broadcast %cst_17 : f32 to vector<2x128xf32>
    %26 = arith.addf %25, %24 : vector<2x128xf32>
    %27 = arith.divf %25, %26 : vector<2x128xf32>
    %28 = vector.extract_strided_slice %27 {offsets = [0, 0], sizes = [2, 64], strides = [1, 1]} : vector<2x128xf32> to vector<2x64xf32>
    %29 = vector.extract_strided_slice %27 {offsets = [0, 64], sizes = [2, 64], strides = [1, 1]} : vector<2x128xf32> to vector<2x64xf32>
    %30 = vector.extract_strided_slice %19 {offsets = [0, 128], sizes = [2, 64], strides = [1, 1]} : vector<2x192xf32> to vector<2x64xf32>
    %31 = vector.extract_strided_slice %18 {offsets = [0, 128], sizes = [2, 64], strides = [1, 1]} : vector<2x192xf32> to vector<2x64xf32>
    %32 = arith.mulf %28, %31 : vector<2x64xf32>
    %33 = arith.addf %30, %32 : vector<2x64xf32>
    %34 = math.tanh %33 : vector<2x64xf32>
    %cst_18 = arith.constant 1.000000e+00 : f32
    %35 = vector.broadcast %cst_18 : f32 to vector<2x64xf32>
    %36 = arith.subf %35, %29 : vector<2x64xf32>
    %37 = arith.mulf %36, %34 : vector<2x64xf32>
    %38 = arith.mulf %29, %15 : vector<2x64xf32>
    %39 = arith.addf %37, %38 : vector<2x64xf32>
    %c0_19 = arith.constant 0 : index
    %c0_20 = arith.constant 0 : index
    %40 = vector.load %arg14[%c0_19, %c0_20] : memref<16x64xf32, #tpu.memory_space<vmem>>, vector<2x64xf32>
    tpu.vector_store %arg14[%c0_19, %c0_20], %39 {strides = array<i32>} : memref<16x64xf32, #tpu.memory_space<vmem>>, vector<2x64xf32>,
    %cst_21 = arith.constant dense<0.000000e+00> : vector<2x192xf32>
    %41 = tpu.matmul %39, %13, %cst_21 {dimension_numbers = #tpu.dot_dimension_numbers<[1], [0], [0], [1], [0, 0, 1, 1], [], []>} : vector<2x64xf32>, vector<64x192xf32>, vector<2x192xf32> -> vector<2x192xf32>
    %42 = vector.broadcast %14 : vector<1x192xf32> to vector<2x192xf32>
    %43 = arith.addf %41, %42 : vector<2x192xf32>
    %44 = vector.extract_strided_slice %12 {offsets = [2, 0], sizes = [2, 192], strides = [1, 1]} : vector<16x192xf32> to vector<2x192xf32>
    %45 = vector.extract_strided_slice %44 {offsets = [0, 0], sizes = [2, 128], strides = [1, 1]} : vector<2x192xf32> to vector<2x128xf32>
    %46 = vector.extract_strided_slice %43 {offsets = [0, 0], sizes = [2, 128], strides = [1, 1]} : vector<2x192xf32> to vector<2x128xf32>
    %47 = arith.addf %45, %46 : vector<2x128xf32>
    %48 = arith.negf %47 : vector<2x128xf32>
    %49 = math.exp %48 : vector<2x128xf32>
    %cst_22 = arith.constant 1.000000e+00 : f32
    %50 = vector.broadcast %cst_22 : f32 to vector<2x128xf32>
    %51 = arith.addf %50, %49 : vector<2x128xf32>
    %52 = arith.divf %50, %51 : vector<2x128xf32>
    %53 = vector.extract_strided_slice %52 {offsets = [0, 0], sizes = [2, 64], strides = [1, 1]} : vector<2x128xf32> to vector<2x64xf32>
    %54 = vector.extract_strided_slice %52 {offsets = [0, 64], sizes = [2, 64], strides = [1, 1]} : vector<2x128xf32> to vector<2x64xf32>
    %55 = vector.extract_strided_slice %44 {offsets = [0, 128], sizes = [2, 64], strides = [1, 1]} : vector<2x192xf32> to vector<2x64xf32>
    %56 = vector.extract_strided_slice %43 {offsets = [0, 128], sizes = [2, 64], strides = [1, 1]} : vector<2x192xf32> to vector<2x64xf32>
    %57 = arith.mulf %53, %56 : vector<2x64xf32>
    %58 = arith.addf %55, %57 : vector<2x64xf32>
    %59 = math.tanh %58 : vector<2x64xf32>
    %cst_23 = arith.constant 1.000000e+00 : f32
    %60 = vector.broadcast %cst_23 : f32 to vector<2x64xf32>
    %61 = arith.subf %60, %54 : vector<2x64xf32>
    %62 = arith.mulf %61, %59 : vector<2x64xf32>
    %63 = arith.mulf %54, %39 : vector<2x64xf32>
    %64 = arith.addf %62, %63 : vector<2x64xf32>
    %c2 = arith.constant 2 : index
    %c0_24 = arith.constant 0 : index
    %65 = vector.load %arg14[%c2, %c0_24] : memref<16x64xf32, #tpu.memory_space<vmem>>, vector<2x64xf32>
    tpu.vector_store %arg14[%c2, %c0_24], %64 {strides = array<i32>} : memref<16x64xf32, #tpu.memory_space<vmem>>, vector<2x64xf32>,
    %cst_25 = arith.constant dense<0.000000e+00> : vector<2x192xf32>
    %66 = tpu.matmul %64, %13, %cst_25 {dimension_numbers = #tpu.dot_dimension_numbers<[1], [0], [0], [1], [0, 0, 1, 1], [], []>} : vector<2x64xf32>, vector<64x192xf32>, vector<2x192xf32> -> vector<2x192xf32>
    %67 = vector.broadcast %14 : vector<1x192xf32> to vector<2x192xf32>
    %68 = arith.addf %66, %67 : vector<2x192xf32>
    %69 = vector.extract_strided_slice %12 {offsets = [4, 0], sizes = [2, 192], strides = [1, 1]} : vector<16x192xf32> to vector<2x192xf32>
    %70 = vector.extract_strided_slice %69 {offsets = [0, 0], sizes = [2, 128], strides = [1, 1]} : vector<2x192xf32> to vector<2x128xf32>
    %71 = vector.extract_strided_slice %68 {offsets = [0, 0], sizes = [2, 128], strides = [1, 1]} : vector<2x192xf32> to vector<2x128xf32>
    %72 = arith.addf %70, %71 : vector<2x128xf32>
    %73 = arith.negf %72 : vector<2x128xf32>
    %74 = math.exp %73 : vector<2x128xf32>
    %cst_26 = arith.constant 1.000000e+00 : f32
    %75 = vector.broadcast %cst_26 : f32 to vector<2x128xf32>
    %76 = arith.addf %75, %74 : vector<2x128xf32>
    %77 = arith.divf %75, %76 : vector<2x128xf32>
    %78 = vector.extract_strided_slice %77 {offsets = [0, 0], sizes = [2, 64], strides = [1, 1]} : vector<2x128xf32> to vector<2x64xf32>
    %79 = vector.extract_strided_slice %77 {offsets = [0, 64], sizes = [2, 64], strides = [1, 1]} : vector<2x128xf32> to vector<2x64xf32>
    %80 = vector.extract_strided_slice %69 {offsets = [0, 128], sizes = [2, 64], strides = [1, 1]} : vector<2x192xf32> to vector<2x64xf32>
    %81 = vector.extract_strided_slice %68 {offsets = [0, 128], sizes = [2, 64], strides = [1, 1]} : vector<2x192xf32> to vector<2x64xf32>
    %82 = arith.mulf %78, %81 : vector<2x64xf32>
    %83 = arith.addf %80, %82 : vector<2x64xf32>
    %84 = math.tanh %83 : vector<2x64xf32>
    %cst_27 = arith.constant 1.000000e+00 : f32
    %85 = vector.broadcast %cst_27 : f32 to vector<2x64xf32>
    %86 = arith.subf %85, %79 : vector<2x64xf32>
    %87 = arith.mulf %86, %84 : vector<2x64xf32>
    %88 = arith.mulf %79, %64 : vector<2x64xf32>
    %89 = arith.addf %87, %88 : vector<2x64xf32>
    %c4 = arith.constant 4 : index
    %c0_28 = arith.constant 0 : index
    %90 = vector.load %arg14[%c4, %c0_28] : memref<16x64xf32, #tpu.memory_space<vmem>>, vector<2x64xf32>
    tpu.vector_store %arg14[%c4, %c0_28], %89 {strides = array<i32>} : memref<16x64xf32, #tpu.memory_space<vmem>>, vector<2x64xf32>,
    %cst_29 = arith.constant dense<0.000000e+00> : vector<2x192xf32>
    %91 = tpu.matmul %89, %13, %cst_29 {dimension_numbers = #tpu.dot_dimension_numbers<[1], [0], [0], [1], [0, 0, 1, 1], [], []>} : vector<2x64xf32>, vector<64x192xf32>, vector<2x192xf32> -> vector<2x192xf32>
    %92 = vector.broadcast %14 : vector<1x192xf32> to vector<2x192xf32>
    %93 = arith.addf %91, %92 : vector<2x192xf32>
    %94 = vector.extract_strided_slice %12 {offsets = [6, 0], sizes = [2, 192], strides = [1, 1]} : vector<16x192xf32> to vector<2x192xf32>
    %95 = vector.extract_strided_slice %94 {offsets = [0, 0], sizes = [2, 128], strides = [1, 1]} : vector<2x192xf32> to vector<2x128xf32>
    %96 = vector.extract_strided_slice %93 {offsets = [0, 0], sizes = [2, 128], strides = [1, 1]} : vector<2x192xf32> to vector<2x128xf32>
    %97 = arith.addf %95, %96 : vector<2x128xf32>
    %98 = arith.negf %97 : vector<2x128xf32>
    %99 = math.exp %98 : vector<2x128xf32>
    %cst_30 = arith.constant 1.000000e+00 : f32
    %100 = vector.broadcast %cst_30 : f32 to vector<2x128xf32>
    %101 = arith.addf %100, %99 : vector<2x128xf32>
    %102 = arith.divf %100, %101 : vector<2x128xf32>
    %103 = vector.extract_strided_slice %102 {offsets = [0, 0], sizes = [2, 64], strides = [1, 1]} : vector<2x128xf32> to vector<2x64xf32>
    %104 = vector.extract_strided_slice %102 {offsets = [0, 64], sizes = [2, 64], strides = [1, 1]} : vector<2x128xf32> to vector<2x64xf32>
    %105 = vector.extract_strided_slice %94 {offsets = [0, 128], sizes = [2, 64], strides = [1, 1]} : vector<2x192xf32> to vector<2x64xf32>
    %106 = vector.extract_strided_slice %93 {offsets = [0, 128], sizes = [2, 64], strides = [1, 1]} : vector<2x192xf32> to vector<2x64xf32>
    %107 = arith.mulf %103, %106 : vector<2x64xf32>
    %108 = arith.addf %105, %107 : vector<2x64xf32>
    %109 = math.tanh %108 : vector<2x64xf32>
    %cst_31 = arith.constant 1.000000e+00 : f32
    %110 = vector.broadcast %cst_31 : f32 to vector<2x64xf32>
    %111 = arith.subf %110, %104 : vector<2x64xf32>
    %112 = arith.mulf %111, %109 : vector<2x64xf32>
    %113 = arith.mulf %104, %89 : vector<2x64xf32>
    %114 = arith.addf %112, %113 : vector<2x64xf32>
    %c6 = arith.constant 6 : index
    %c0_32 = arith.constant 0 : index
    %115 = vector.load %arg14[%c6, %c0_32] : memref<16x64xf32, #tpu.memory_space<vmem>>, vector<2x64xf32>
    tpu.vector_store %arg14[%c6, %c0_32], %114 {strides = array<i32>} : memref<16x64xf32, #tpu.memory_space<vmem>>, vector<2x64xf32>,
    %cst_33 = arith.constant dense<0.000000e+00> : vector<2x192xf32>
    %116 = tpu.matmul %114, %13, %cst_33 {dimension_numbers = #tpu.dot_dimension_numbers<[1], [0], [0], [1], [0, 0, 1, 1], [], []>} : vector<2x64xf32>, vector<64x192xf32>, vector<2x192xf32> -> vector<2x192xf32>
    %117 = vector.broadcast %14 : vector<1x192xf32> to vector<2x192xf32>
    %118 = arith.addf %116, %117 : vector<2x192xf32>
    %119 = vector.extract_strided_slice %12 {offsets = [8, 0], sizes = [2, 192], strides = [1, 1]} : vector<16x192xf32> to vector<2x192xf32>
    %120 = vector.extract_strided_slice %119 {offsets = [0, 0], sizes = [2, 128], strides = [1, 1]} : vector<2x192xf32> to vector<2x128xf32>
    %121 = vector.extract_strided_slice %118 {offsets = [0, 0], sizes = [2, 128], strides = [1, 1]} : vector<2x192xf32> to vector<2x128xf32>
    %122 = arith.addf %120, %121 : vector<2x128xf32>
    %123 = arith.negf %122 : vector<2x128xf32>
    %124 = math.exp %123 : vector<2x128xf32>
    %cst_34 = arith.constant 1.000000e+00 : f32
    %125 = vector.broadcast %cst_34 : f32 to vector<2x128xf32>
    %126 = arith.addf %125, %124 : vector<2x128xf32>
    %127 = arith.divf %125, %126 : vector<2x128xf32>
    %128 = vector.extract_strided_slice %127 {offsets = [0, 0], sizes = [2, 64], strides = [1, 1]} : vector<2x128xf32> to vector<2x64xf32>
    %129 = vector.extract_strided_slice %127 {offsets = [0, 64], sizes = [2, 64], strides = [1, 1]} : vector<2x128xf32> to vector<2x64xf32>
    %130 = vector.extract_strided_slice %119 {offsets = [0, 128], sizes = [2, 64], strides = [1, 1]} : vector<2x192xf32> to vector<2x64xf32>
    %131 = vector.extract_strided_slice %118 {offsets = [0, 128], sizes = [2, 64], strides = [1, 1]} : vector<2x192xf32> to vector<2x64xf32>
    %132 = arith.mulf %128, %131 : vector<2x64xf32>
    %133 = arith.addf %130, %132 : vector<2x64xf32>
    %134 = math.tanh %133 : vector<2x64xf32>
    %cst_35 = arith.constant 1.000000e+00 : f32
    %135 = vector.broadcast %cst_35 : f32 to vector<2x64xf32>
    %136 = arith.subf %135, %129 : vector<2x64xf32>
    %137 = arith.mulf %136, %134 : vector<2x64xf32>
    %138 = arith.mulf %129, %114 : vector<2x64xf32>
    %139 = arith.addf %137, %138 : vector<2x64xf32>
    %c8 = arith.constant 8 : index
    %c0_36 = arith.constant 0 : index
    %140 = vector.load %arg14[%c8, %c0_36] : memref<16x64xf32, #tpu.memory_space<vmem>>, vector<2x64xf32>
    tpu.vector_store %arg14[%c8, %c0_36], %139 {strides = array<i32>} : memref<16x64xf32, #tpu.memory_space<vmem>>, vector<2x64xf32>,
    %cst_37 = arith.constant dense<0.000000e+00> : vector<2x192xf32>
    %141 = tpu.matmul %139, %13, %cst_37 {dimension_numbers = #tpu.dot_dimension_numbers<[1], [0], [0], [1], [0, 0, 1, 1], [], []>} : vector<2x64xf32>, vector<64x192xf32>, vector<2x192xf32> -> vector<2x192xf32>
    %142 = vector.broadcast %14 : vector<1x192xf32> to vector<2x192xf32>
    %143 = arith.addf %141, %142 : vector<2x192xf32>
    %144 = vector.extract_strided_slice %12 {offsets = [10, 0], sizes = [2, 192], strides = [1, 1]} : vector<16x192xf32> to vector<2x192xf32>
    %145 = vector.extract_strided_slice %144 {offsets = [0, 0], sizes = [2, 128], strides = [1, 1]} : vector<2x192xf32> to vector<2x128xf32>
    %146 = vector.extract_strided_slice %143 {offsets = [0, 0], sizes = [2, 128], strides = [1, 1]} : vector<2x192xf32> to vector<2x128xf32>
    %147 = arith.addf %145, %146 : vector<2x128xf32>
    %148 = arith.negf %147 : vector<2x128xf32>
    %149 = math.exp %148 : vector<2x128xf32>
    %cst_38 = arith.constant 1.000000e+00 : f32
    %150 = vector.broadcast %cst_38 : f32 to vector<2x128xf32>
    %151 = arith.addf %150, %149 : vector<2x128xf32>
    %152 = arith.divf %150, %151 : vector<2x128xf32>
    %153 = vector.extract_strided_slice %152 {offsets = [0, 0], sizes = [2, 64], strides = [1, 1]} : vector<2x128xf32> to vector<2x64xf32>
    %154 = vector.extract_strided_slice %152 {offsets = [0, 64], sizes = [2, 64], strides = [1, 1]} : vector<2x128xf32> to vector<2x64xf32>
    %155 = vector.extract_strided_slice %144 {offsets = [0, 128], sizes = [2, 64], strides = [1, 1]} : vector<2x192xf32> to vector<2x64xf32>
    %156 = vector.extract_strided_slice %143 {offsets = [0, 128], sizes = [2, 64], strides = [1, 1]} : vector<2x192xf32> to vector<2x64xf32>
    %157 = arith.mulf %153, %156 : vector<2x64xf32>
    %158 = arith.addf %155, %157 : vector<2x64xf32>
    %159 = math.tanh %158 : vector<2x64xf32>
    %cst_39 = arith.constant 1.000000e+00 : f32
    %160 = vector.broadcast %cst_39 : f32 to vector<2x64xf32>
    %161 = arith.subf %160, %154 : vector<2x64xf32>
    %162 = arith.mulf %161, %159 : vector<2x64xf32>
    %163 = arith.mulf %154, %139 : vector<2x64xf32>
    %164 = arith.addf %162, %163 : vector<2x64xf32>
    %c10 = arith.constant 10 : index
    %c0_40 = arith.constant 0 : index
    %165 = vector.load %arg14[%c10, %c0_40] : memref<16x64xf32, #tpu.memory_space<vmem>>, vector<2x64xf32>
    tpu.vector_store %arg14[%c10, %c0_40], %164 {strides = array<i32>} : memref<16x64xf32, #tpu.memory_space<vmem>>, vector<2x64xf32>,
    %cst_41 = arith.constant dense<0.000000e+00> : vector<2x192xf32>
    %166 = tpu.matmul %164, %13, %cst_41 {dimension_numbers = #tpu.dot_dimension_numbers<[1], [0], [0], [1], [0, 0, 1, 1], [], []>} : vector<2x64xf32>, vector<64x192xf32>, vector<2x192xf32> -> vector<2x192xf32>
    %167 = vector.broadcast %14 : vector<1x192xf32> to vector<2x192xf32>
    %168 = arith.addf %166, %167 : vector<2x192xf32>
    %169 = vector.extract_strided_slice %12 {offsets = [12, 0], sizes = [2, 192], strides = [1, 1]} : vector<16x192xf32> to vector<2x192xf32>
    %170 = vector.extract_strided_slice %169 {offsets = [0, 0], sizes = [2, 128], strides = [1, 1]} : vector<2x192xf32> to vector<2x128xf32>
    %171 = vector.extract_strided_slice %168 {offsets = [0, 0], sizes = [2, 128], strides = [1, 1]} : vector<2x192xf32> to vector<2x128xf32>
    %172 = arith.addf %170, %171 : vector<2x128xf32>
    %173 = arith.negf %172 : vector<2x128xf32>
    %174 = math.exp %173 : vector<2x128xf32>
    %cst_42 = arith.constant 1.000000e+00 : f32
    %175 = vector.broadcast %cst_42 : f32 to vector<2x128xf32>
    %176 = arith.addf %175, %174 : vector<2x128xf32>
    %177 = arith.divf %175, %176 : vector<2x128xf32>
    %178 = vector.extract_strided_slice %177 {offsets = [0, 0], sizes = [2, 64], strides = [1, 1]} : vector<2x128xf32> to vector<2x64xf32>
    %179 = vector.extract_strided_slice %177 {offsets = [0, 64], sizes = [2, 64], strides = [1, 1]} : vector<2x128xf32> to vector<2x64xf32>
    %180 = vector.extract_strided_slice %169 {offsets = [0, 128], sizes = [2, 64], strides = [1, 1]} : vector<2x192xf32> to vector<2x64xf32>
    %181 = vector.extract_strided_slice %168 {offsets = [0, 128], sizes = [2, 64], strides = [1, 1]} : vector<2x192xf32> to vector<2x64xf32>
    %182 = arith.mulf %178, %181 : vector<2x64xf32>
    %183 = arith.addf %180, %182 : vector<2x64xf32>
    %184 = math.tanh %183 : vector<2x64xf32>
    %cst_43 = arith.constant 1.000000e+00 : f32
    %185 = vector.broadcast %cst_43 : f32 to vector<2x64xf32>
    %186 = arith.subf %185, %179 : vector<2x64xf32>
    %187 = arith.mulf %186, %184 : vector<2x64xf32>
    %188 = arith.mulf %179, %164 : vector<2x64xf32>
    %189 = arith.addf %187, %188 : vector<2x64xf32>
    %c12 = arith.constant 12 : index
    %c0_44 = arith.constant 0 : index
    %190 = vector.load %arg14[%c12, %c0_44] : memref<16x64xf32, #tpu.memory_space<vmem>>, vector<2x64xf32>
    tpu.vector_store %arg14[%c12, %c0_44], %189 {strides = array<i32>} : memref<16x64xf32, #tpu.memory_space<vmem>>, vector<2x64xf32>,
    %cst_45 = arith.constant dense<0.000000e+00> : vector<2x192xf32>
    %191 = tpu.matmul %189, %13, %cst_45 {dimension_numbers = #tpu.dot_dimension_numbers<[1], [0], [0], [1], [0, 0, 1, 1], [], []>} : vector<2x64xf32>, vector<64x192xf32>, vector<2x192xf32> -> vector<2x192xf32>
    %192 = vector.broadcast %14 : vector<1x192xf32> to vector<2x192xf32>
    %193 = arith.addf %191, %192 : vector<2x192xf32>
    %194 = vector.extract_strided_slice %12 {offsets = [14, 0], sizes = [2, 192], strides = [1, 1]} : vector<16x192xf32> to vector<2x192xf32>
    %195 = vector.extract_strided_slice %194 {offsets = [0, 0], sizes = [2, 128], strides = [1, 1]} : vector<2x192xf32> to vector<2x128xf32>
    %196 = vector.extract_strided_slice %193 {offsets = [0, 0], sizes = [2, 128], strides = [1, 1]} : vector<2x192xf32> to vector<2x128xf32>
    %197 = arith.addf %195, %196 : vector<2x128xf32>
    %198 = arith.negf %197 : vector<2x128xf32>
    %199 = math.exp %198 : vector<2x128xf32>
    %cst_46 = arith.constant 1.000000e+00 : f32
    %200 = vector.broadcast %cst_46 : f32 to vector<2x128xf32>
    %201 = arith.addf %200, %199 : vector<2x128xf32>
    %202 = arith.divf %200, %201 : vector<2x128xf32>
    %203 = vector.extract_strided_slice %202 {offsets = [0, 0], sizes = [2, 64], strides = [1, 1]} : vector<2x128xf32> to vector<2x64xf32>
    %204 = vector.extract_strided_slice %202 {offsets = [0, 64], sizes = [2, 64], strides = [1, 1]} : vector<2x128xf32> to vector<2x64xf32>
    %205 = vector.extract_strided_slice %194 {offsets = [0, 128], sizes = [2, 64], strides = [1, 1]} : vector<2x192xf32> to vector<2x64xf32>
    %206 = vector.extract_strided_slice %193 {offsets = [0, 128], sizes = [2, 64], strides = [1, 1]} : vector<2x192xf32> to vector<2x64xf32>
    %207 = arith.mulf %203, %206 : vector<2x64xf32>
    %208 = arith.addf %205, %207 : vector<2x64xf32>
    %209 = math.tanh %208 : vector<2x64xf32>
    %cst_47 = arith.constant 1.000000e+00 : f32
    %210 = vector.broadcast %cst_47 : f32 to vector<2x64xf32>
    %211 = arith.subf %210, %204 : vector<2x64xf32>
    %212 = arith.mulf %211, %209 : vector<2x64xf32>
    %213 = arith.mulf %204, %189 : vector<2x64xf32>
    %214 = arith.addf %212, %213 : vector<2x64xf32>
    %c14 = arith.constant 14 : index
    %c0_48 = arith.constant 0 : index
    %215 = vector.load %arg14[%c14, %c0_48] : memref<16x64xf32, #tpu.memory_space<vmem>>, vector<2x64xf32>
    tpu.vector_store %arg14[%c14, %c0_48], %214 {strides = array<i32>} : memref<16x64xf32, #tpu.memory_space<vmem>>, vector<2x64xf32>,
    %c0_49 = arith.constant 0 : index
    %c0_50 = arith.constant 0 : index
    %216 = vector.load %arg14[%c0_49, %c0_50] : memref<16x64xf32, #tpu.memory_space<vmem>>, vector<16x64xf32>
    %c0_51 = arith.constant 0 : index
    %c0_52 = arith.constant 0 : index
    %217 = vector.load %arg8[%c0_51, %c0_52] : memref<64x64xf32, #tpu.memory_space<vmem>>, vector<64x64xf32>
    %cst_53 = arith.constant dense<0.000000e+00> : vector<16x64xf32>
    %218 = tpu.matmul %216, %217, %cst_53 {dimension_numbers = #tpu.dot_dimension_numbers<[1], [0], [0], [1], [0, 0, 1, 1], [], []>} : vector<16x64xf32>, vector<64x64xf32>, vector<16x64xf32> -> vector<16x64xf32>
    %c0_54 = arith.constant 0 : index
    %c0_55 = arith.constant 0 : index
    %219 = vector.load %arg9[%c0_54, %c0_55] : memref<1x64xf32, #tpu.memory_space<vmem>>, vector<1x64xf32>
    %220 = vector.broadcast %219 : vector<1x64xf32> to vector<16x64xf32>
    %221 = arith.addf %218, %220 : vector<16x64xf32>
    %c0_56 = arith.constant 0 : index
    %c0_57 = arith.constant 0 : index
    %222 = vector.load %arg1[%c0_56, %c0_57] : memref<16x64xf32, #tpu.memory_space<vmem>>, vector<16x64xf32>
    %223 = vector.extract_strided_slice %221 {offsets = [0, 0], sizes = [2, 64], strides = [1, 1]} : vector<16x64xf32> to vector<2x64xf32>
    %224 = vector.extract_strided_slice %221 {offsets = [2, 0], sizes = [2, 64], strides = [1, 1]} : vector<16x64xf32> to vector<2x64xf32>
    %225 = arith.maximumf %223, %224 : vector<2x64xf32>
    %226 = vector.extract_strided_slice %221 {offsets = [4, 0], sizes = [2, 64], strides = [1, 1]} : vector<16x64xf32> to vector<2x64xf32>
    %227 = arith.maximumf %225, %226 : vector<2x64xf32>
    %228 = vector.extract_strided_slice %221 {offsets = [6, 0], sizes = [2, 64], strides = [1, 1]} : vector<16x64xf32> to vector<2x64xf32>
    %229 = arith.maximumf %227, %228 : vector<2x64xf32>
    %230 = vector.extract_strided_slice %221 {offsets = [8, 0], sizes = [2, 64], strides = [1, 1]} : vector<16x64xf32> to vector<2x64xf32>
    %231 = arith.maximumf %229, %230 : vector<2x64xf32>
    %232 = vector.extract_strided_slice %221 {offsets = [10, 0], sizes = [2, 64], strides = [1, 1]} : vector<16x64xf32> to vector<2x64xf32>
    %233 = arith.maximumf %231, %232 : vector<2x64xf32>
    %234 = vector.extract_strided_slice %221 {offsets = [12, 0], sizes = [2, 64], strides = [1, 1]} : vector<16x64xf32> to vector<2x64xf32>
    %235 = arith.maximumf %233, %234 : vector<2x64xf32>
    %236 = vector.extract_strided_slice %221 {offsets = [14, 0], sizes = [2, 64], strides = [1, 1]} : vector<16x64xf32> to vector<2x64xf32>
    %237 = arith.maximumf %235, %236 : vector<2x64xf32>
    %238 = tpu.concatenate %237, %237, %237, %237, %237, %237, %237, %237 in 0 : vector<2x64xf32>, vector<2x64xf32>, vector<2x64xf32>, vector<2x64xf32>, vector<2x64xf32>, vector<2x64xf32>, vector<2x64xf32>, vector<2x64xf32> -> vector<16x64xf32>
    %239 = arith.subf %221, %238 : vector<16x64xf32>
    %240 = math.exp %239 : vector<16x64xf32>
    %241 = arith.mulf %240, %222 : vector<16x64xf32>
    %242 = arith.mulf %216, %222 : vector<16x64xf32>
    %243 = vector.extract_strided_slice %240 {offsets = [0, 0], sizes = [2, 64], strides = [1, 1]} : vector<16x64xf32> to vector<2x64xf32>
    %244 = vector.extract_strided_slice %241 {offsets = [0, 0], sizes = [2, 64], strides = [1, 1]} : vector<16x64xf32> to vector<2x64xf32>
    %245 = vector.extract_strided_slice %242 {offsets = [0, 0], sizes = [2, 64], strides = [1, 1]} : vector<16x64xf32> to vector<2x64xf32>
    %246 = vector.extract_strided_slice %240 {offsets = [2, 0], sizes = [2, 64], strides = [1, 1]} : vector<16x64xf32> to vector<2x64xf32>
    %247 = arith.addf %243, %246 : vector<2x64xf32>
    %248 = vector.extract_strided_slice %241 {offsets = [2, 0], sizes = [2, 64], strides = [1, 1]} : vector<16x64xf32> to vector<2x64xf32>
    %249 = arith.addf %244, %248 : vector<2x64xf32>
    %250 = vector.extract_strided_slice %242 {offsets = [2, 0], sizes = [2, 64], strides = [1, 1]} : vector<16x64xf32> to vector<2x64xf32>
    %251 = arith.addf %245, %250 : vector<2x64xf32>
    %252 = vector.extract_strided_slice %240 {offsets = [4, 0], sizes = [2, 64], strides = [1, 1]} : vector<16x64xf32> to vector<2x64xf32>
    %253 = arith.addf %247, %252 : vector<2x64xf32>
    %254 = vector.extract_strided_slice %241 {offsets = [4, 0], sizes = [2, 64], strides = [1, 1]} : vector<16x64xf32> to vector<2x64xf32>
    %255 = arith.addf %249, %254 : vector<2x64xf32>
    %256 = vector.extract_strided_slice %242 {offsets = [4, 0], sizes = [2, 64], strides = [1, 1]} : vector<16x64xf32> to vector<2x64xf32>
    %257 = arith.addf %251, %256 : vector<2x64xf32>
    %258 = vector.extract_strided_slice %240 {offsets = [6, 0], sizes = [2, 64], strides = [1, 1]} : vector<16x64xf32> to vector<2x64xf32>
    %259 = arith.addf %253, %258 : vector<2x64xf32>
    %260 = vector.extract_strided_slice %241 {offsets = [6, 0], sizes = [2, 64], strides = [1, 1]} : vector<16x64xf32> to vector<2x64xf32>
    %261 = arith.addf %255, %260 : vector<2x64xf32>
    %262 = vector.extract_strided_slice %242 {offsets = [6, 0], sizes = [2, 64], strides = [1, 1]} : vector<16x64xf32> to vector<2x64xf32>
    %263 = arith.addf %257, %262 : vector<2x64xf32>
    %264 = vector.extract_strided_slice %240 {offsets = [8, 0], sizes = [2, 64], strides = [1, 1]} : vector<16x64xf32> to vector<2x64xf32>
    %265 = arith.addf %259, %264 : vector<2x64xf32>
    %266 = vector.extract_strided_slice %241 {offsets = [8, 0], sizes = [2, 64], strides = [1, 1]} : vector<16x64xf32> to vector<2x64xf32>
    %267 = arith.addf %261, %266 : vector<2x64xf32>
    %268 = vector.extract_strided_slice %242 {offsets = [8, 0], sizes = [2, 64], strides = [1, 1]} : vector<16x64xf32> to vector<2x64xf32>
    %269 = arith.addf %263, %268 : vector<2x64xf32>
    %270 = vector.extract_strided_slice %240 {offsets = [10, 0], sizes = [2, 64], strides = [1, 1]} : vector<16x64xf32> to vector<2x64xf32>
    %271 = arith.addf %265, %270 : vector<2x64xf32>
    %272 = vector.extract_strided_slice %241 {offsets = [10, 0], sizes = [2, 64], strides = [1, 1]} : vector<16x64xf32> to vector<2x64xf32>
    %273 = arith.addf %267, %272 : vector<2x64xf32>
    %274 = vector.extract_strided_slice %242 {offsets = [10, 0], sizes = [2, 64], strides = [1, 1]} : vector<16x64xf32> to vector<2x64xf32>
    %275 = arith.addf %269, %274 : vector<2x64xf32>
    %276 = vector.extract_strided_slice %240 {offsets = [12, 0], sizes = [2, 64], strides = [1, 1]} : vector<16x64xf32> to vector<2x64xf32>
    %277 = arith.addf %271, %276 : vector<2x64xf32>
    %278 = vector.extract_strided_slice %241 {offsets = [12, 0], sizes = [2, 64], strides = [1, 1]} : vector<16x64xf32> to vector<2x64xf32>
    %279 = arith.addf %273, %278 : vector<2x64xf32>
    %280 = vector.extract_strided_slice %242 {offsets = [12, 0], sizes = [2, 64], strides = [1, 1]} : vector<16x64xf32> to vector<2x64xf32>
    %281 = arith.addf %275, %280 : vector<2x64xf32>
    %282 = vector.extract_strided_slice %240 {offsets = [14, 0], sizes = [2, 64], strides = [1, 1]} : vector<16x64xf32> to vector<2x64xf32>
    %283 = arith.addf %277, %282 : vector<2x64xf32>
    %284 = vector.extract_strided_slice %241 {offsets = [14, 0], sizes = [2, 64], strides = [1, 1]} : vector<16x64xf32> to vector<2x64xf32>
    %285 = arith.addf %279, %284 : vector<2x64xf32>
    %286 = vector.extract_strided_slice %242 {offsets = [14, 0], sizes = [2, 64], strides = [1, 1]} : vector<16x64xf32> to vector<2x64xf32>
    %287 = arith.addf %281, %286 : vector<2x64xf32>
    %288 = arith.divf %285, %283 : vector<2x64xf32>
    %289 = tpu.concatenate %288, %287 in 1 : vector<2x64xf32>, vector<2x64xf32> -> vector<2x128xf32>
    %c0_58 = arith.constant 0 : index
    %c0_59 = arith.constant 0 : index
    %290 = vector.load %arg10[%c0_58, %c0_59] : memref<128x32xf32, #tpu.memory_space<vmem>>, vector<128x32xf32>
    %cst_60 = arith.constant dense<0.000000e+00> : vector<2x32xf32>
    %291 = tpu.matmul %289, %290, %cst_60 {dimension_numbers = #tpu.dot_dimension_numbers<[1], [0], [0], [1], [0, 0, 1, 1], [], []>} : vector<2x128xf32>, vector<128x32xf32>, vector<2x32xf32> -> vector<2x32xf32>
    %292 = math.tanh %291 : vector<2x32xf32>
    %c0_61 = arith.constant 0 : index
    %c0_62 = arith.constant 0 : index
    %293 = vector.load %arg11[%c0_61, %c0_62] : memref<32x4xf32, #tpu.memory_space<vmem>>, vector<32x4xf32>
    %cst_63 = arith.constant dense<0.000000e+00> : vector<2x4xf32>
    %294 = tpu.matmul %292, %293, %cst_63 {dimension_numbers = #tpu.dot_dimension_numbers<[1], [0], [0], [1], [0, 0, 1, 1], [], []>} : vector<2x32xf32>, vector<32x4xf32>, vector<2x4xf32> -> vector<2x4xf32>
    %c0_64 = arith.constant 0 : index
    %c0_65 = arith.constant 0 : index
    %295 = vector.load %arg12[%c0_64, %c0_65] : memref<1x4xf32, #tpu.memory_space<vmem>>, vector<1x4xf32>
    %296 = vector.broadcast %295 : vector<1x4xf32> to vector<2x4xf32>
    %297 = arith.addf %294, %296 : vector<2x4xf32>
    %298 = arith.negf %297 : vector<2x4xf32>
    %299 = math.exp %298 : vector<2x4xf32>
    %cst_66 = arith.constant 1.000000e+00 : f32
    %300 = vector.broadcast %cst_66 : f32 to vector<2x4xf32>
    %301 = arith.addf %300, %299 : vector<2x4xf32>
    %302 = arith.divf %300, %301 : vector<2x4xf32>
    %c0_67 = arith.constant 0 : index
    %c0_68 = arith.constant 0 : index
    %303 = vector.load %arg13[%c0_67, %c0_68] : memref<2x4xf32, #tpu.memory_space<vmem>>, vector<2x4xf32>
    tpu.vector_store %arg13[%c0_67, %c0_68], %302 {strides = array<i32>} : memref<2x4xf32, #tpu.memory_space<vmem>>, vector<2x4xf32>,
    return
  }
}

</mosaic_0001>

<llo_original>
// kernel: tpu_custom_call.1
$region0: #{tpu_custom_call.1}
  #allocation0 [shape = 'u32[]', space=smem, size = 0x4, offset = 0x4, fixed_abs, tag = 'smem constant byte address 0x4 - core index']
  #allocation1 [shape = 'u32[144,128]{1,0:T(1,128)}', space=vmem, size = 0x12000, scoped, tag = 'internal scratch']
  #allocation2 [shape = 'f32[16,64]{1,0:T(8,128)}', space=vmem, size = 0x2000, scoped, tag = 'scratch operand']
  %s0 = inlined_call_operand.hbm [shape: f32[16,32], index: 0, kind: input, shape index: {}]
  %s1 = inlined_call_operand.hbm [shape: f32[16,64], index: 1, kind: input, shape index: {}]
  %s2 = inlined_call_operand.hbm [shape: f32[32,64], index: 2, kind: input, shape index: {}]
  %s3 = inlined_call_operand.hbm [shape: f32[1,64], index: 3, kind: input, shape index: {}]
  %s4 = inlined_call_operand.vmem [shape: f32[64,192], index: 4, kind: input, shape index: {}]
  %s5 = inlined_call_operand.vmem [shape: f32[1,192], index: 5, kind: input, shape index: {}]
  %s6 = inlined_call_operand.hbm [shape: f32[64,192], index: 6, kind: input, shape index: {}]
  %s7 = inlined_call_operand.hbm [shape: f32[1,192], index: 7, kind: input, shape index: {}]
  %s8 = inlined_call_operand.vmem [shape: f32[64,64], index: 8, kind: input, shape index: {}]
  %s9 = inlined_call_operand.hbm [shape: f32[1,64], index: 9, kind: input, shape index: {}]
  %s10 = inlined_call_operand.vmem [shape: f32[128,32], index: 10, kind: input, shape index: {}]
  %s11 = inlined_call_operand.vmem [shape: f32[32,4], index: 11, kind: input, shape index: {}]
  %s12 = inlined_call_operand.vmem [shape: f32[1,4], index: 12, kind: input, shape index: {}]
  %s13 = inlined_call_operand.hbm [shape: f32[2,4], index: 13, kind: output, shape index: {}]
  %s14 = sld [smem:[#allocation0]]
  $region90: #{tpu_custom_call.1} parent=0
    _
  %s16 = ssub.s32 1, %s14
  %s17 = scalar_select 0, %s16, %s14
  $region1: #{tpu_custom_call.1} parent=0
    #allocation3 [shape = 'u8[8192]{0}', space=vmem, size = 0x2000, scoped, tag = 'input window, operand 0, single buffered']
    #allocation4 [shape = 's32[1]{0}', space=sflag, size = 0x4, scoped, tag = 'scoped memory for tpu_custom_call.1']
    #allocation5 [shape = 's32[1]{0}', space=sflag, size = 0x4, scoped, tag = 'scoped memory for tpu_custom_call.1']
    #allocation6 [shape = 'u8[8192]{0}', space=vmem, size = 0x2000, scoped, tag = 'input window, operand 1, single buffered']
    #allocation7 [shape = 's32[1]{0}', space=sflag, size = 0x4, scoped, tag = 'scoped memory for tpu_custom_call.1']
    #allocation8 [shape = 'u8[16384]{0}', space=vmem, size = 0x4000, scoped, tag = 'input window, operand 2, single buffered']
    #allocation9 [shape = 'u8[512]{0}', space=vmem, size = 0x400, scoped, tag = 'input window, operand 3, single buffered']
    #allocation10 [shape = 's32[1]{0}', space=sflag, size = 0x4, scoped, tag = 'scoped memory for tpu_custom_call.1']
    #allocation11 [shape = 'u8[65536]{0}', space=vmem, size = 0x10000, scoped, tag = 'input window, operand 6, single buffered']
    #allocation12 [shape = 'u8[1024]{0}', space=vmem, size = 0x400, scoped, tag = 'input window, operand 7, single buffered']
    #allocation13 [shape = 's32[1]{0}', space=sflag, size = 0x4, scoped, tag = 'scoped memory for tpu_custom_call.1']
    #allocation14 [shape = 'u8[512]{0}', space=vmem, size = 0x400, scoped, tag = 'input window, operand 9, single buffered']
    #allocation15 [shape = 'u8[1024]{0}', space=vmem, size = 0x400, scoped, tag = 'output window, operand 0, single buffered']
    %18 = vsyncpa [#allocation4], 0
    %19 = vsyncpa [#allocation7], 0
    %20 = vsyncpa [#allocation10], 0
    %21 = vsyncpa [#allocation13], 0
    %22 = vsyncpa [#allocation5], 0
    // Predicated region
    $region2: #{tpu_custom_call.1} parent=1 // pred_check
      _
    $region3: #{tpu_custom_call.1} parent=1 // pred_check_branch
      %24 = sbr.rel (0) target = $region5
    $region4: #{tpu_custom_call.1} parent=1 // pred_region
      %s26 = ssub.s32 256, 256
      %27 = vsyncadd [#allocation4], %s26
      %s28 = sshll.u32 [#allocation3], 4
      %s29 = int_to_ptr.vmem [resolvable:$true] %s28
      %34 = dma.hbm_to_vmem [thread:$0]  %s0, 256, %s29, [#allocation4], 128, 128, 8
    $region5: #{tpu_custom_call.1} parent=1 // pred_fallthru
      _
    // Predicated region
    $region6: #{tpu_custom_call.1} parent=1 // pred_check
      _
    $region7: #{tpu_custom_call.1} parent=1 // pred_check_branch
      %36 = sbr.rel (0) target = $region9
    $region8: #{tpu_custom_call.1} parent=1 // pred_region
      %s38 = ssub.s32 256, 256
      %39 = vsyncadd [#allocation7], %s38
      %s40 = sshll.u32 [#allocation6], 4
      %s41 = int_to_ptr.vmem [resolvable:$true] %s40
      %46 = dma.hbm_to_vmem [thread:$0]  %s1, 256, %s41, [#allocation7], 128, 128, 8
    $region9: #{tpu_custom_call.1} parent=1 // pred_fallthru
      _
    // Predicated region
    $region10: #{tpu_custom_call.1} parent=1 // pred_check
      _
    $region11: #{tpu_custom_call.1} parent=1 // pred_check_branch
      %48 = sbr.rel (0) target = $region13
    $region12: #{tpu_custom_call.1} parent=1 // pred_region
      %s50 = ssub.s32 512, 512
      %51 = vsyncadd [#allocation7], %s50
      %s52 = sshll.u32 [#allocation8], 4
      %s53 = int_to_ptr.vmem [resolvable:$true] %s52
      %58 = dma.hbm_to_vmem [thread:$0]  %s2, 512, %s53, [#allocation7], 128, 128, 8
    $region13: #{tpu_custom_call.1} parent=1 // pred_fallthru
      _
    // Predicated region
    $region14: #{tpu_custom_call.1} parent=1 // pred_check
      _
    $region15: #{tpu_custom_call.1} parent=1 // pred_check_branch
      %60 = sbr.rel (0) target = $region17
    $region16: #{tpu_custom_call.1} parent=1 // pred_region
      %s62 = ssub.s32 16, 16
      %63 = vsyncadd [#allocation10], %s62
      %s65 = sshll.u32 [#allocation9], 4
      %s66 = int_to_ptr.vmem [resolvable:$true] %s65
      %68 = dma.hbm_to_vmem [thread:$0]  %s3, 16, %s66, [#allocation10]
    $region17: #{tpu_custom_call.1} parent=1 // pred_fallthru
      _
    // Predicated region
    $region18: #{tpu_custom_call.1} parent=1 // pred_check
      _
    $region19: #{tpu_custom_call.1} parent=1 // pred_check_branch
      %70 = sbr.rel (0) target = $region21
    $region20: #{tpu_custom_call.1} parent=1 // pred_region
      _
    $region21: #{tpu_custom_call.1} parent=1 // pred_fallthru
      _
    // Predicated region
    $region22: #{tpu_custom_call.1} parent=1 // pred_check
      _
    $region23: #{tpu_custom_call.1} parent=1 // pred_check_branch
      %72 = sbr.rel (0) target = $region25
    $region24: #{tpu_custom_call.1} parent=1 // pred_region
      _
    $region25: #{tpu_custom_call.1} parent=1 // pred_fallthru
      _
    // Predicated region
    $region26: #{tpu_custom_call.1} parent=1 // pred_check
      _
    $region27: #{tpu_custom_call.1} parent=1 // pred_check_branch
      %74 = sbr.rel (0) target = $region29
    $region28: #{tpu_custom_call.1} parent=1 // pred_region
      %s76 = ssub.s32 2048, 2048
      %77 = vsyncadd [#allocation10], %s76
      %s78 = sshll.u32 [#allocation11], 4
      %s79 = int_to_ptr.vmem [resolvable:$true] %s78
      %84 = dma.hbm_to_vmem [thread:$0]  %s6, 2048, %s79, [#allocation10], 256, 256, 16
    $region29: #{tpu_custom_call.1} parent=1 // pred_fallthru
      _
    // Predicated region
    $region30: #{tpu_custom_call.1} parent=1 // pred_check
      _
    $region31: #{tpu_custom_call.1} parent=1 // pred_check_branch
      %86 = sbr.rel (0) target = $region33
    $region32: #{tpu_custom_call.1} parent=1 // pred_region
      %s88 = ssub.s32 32, 32
      %89 = vsyncadd [#allocation13], %s88
      %s91 = sshll.u32 [#allocation12], 4
      %s92 = int_to_ptr.vmem [resolvable:$true] %s91
      %94 = dma.hbm_to_vmem [thread:$0]  %s7, 32, %s92, [#allocation13]
    $region33: #{tpu_custom_call.1} parent=1 // pred_fallthru
      _
    // Predicated region
    $region34: #{tpu_custom_call.1} parent=1 // pred_check
      _
    $region35: #{tpu_custom_call.1} parent=1 // pred_check_branch
      %96 = sbr.rel (0) target = $region37
    $region36: #{tpu_custom_call.1} parent=1 // pred_region
      _
    $region37: #{tpu_custom_call.1} parent=1 // pred_fallthru
      _
    // Predicated region
    $region38: #{tpu_custom_call.1} parent=1 // pred_check
      _
    $region39: #{tpu_custom_call.1} parent=1 // pred_check_branch
      %98 = sbr.rel (0) target = $region41
    $region40: #{tpu_custom_call.1} parent=1 // pred_region
      %s100 = ssub.s32 16, 16
      %101 = vsyncadd [#allocation13], %s100
      %s103 = sshll.u32 [#allocation14], 4
      %s104 = int_to_ptr.vmem [resolvable:$true] %s103
      %106 = dma.hbm_to_vmem [thread:$0]  %s9, 16, %s104, [#allocation13]
    $region41: #{tpu_custom_call.1} parent=1 // pred_fallthru
      _
    // Predicated region
    $region42: #{tpu_custom_call.1} parent=1 // pred_check
      _
    $region43: #{tpu_custom_call.1} parent=1 // pred_check_branch
      %108 = sbr.rel (0) target = $region45
    $region44: #{tpu_custom_call.1} parent=1 // pred_region
      _
    $region45: #{tpu_custom_call.1} parent=1 // pred_fallthru
      _
    // Predicated region
    $region46: #{tpu_custom_call.1} parent=1 // pred_check
      _
    $region47: #{tpu_custom_call.1} parent=1 // pred_check_branch
      %110 = sbr.rel (0) target = $region49
    $region48: #{tpu_custom_call.1} parent=1 // pred_region
      _
    $region49: #{tpu_custom_call.1} parent=1 // pred_fallthru
      _
    // Predicated region
    $region50: #{tpu_custom_call.1} parent=1 // pred_check
      _
    $region51: #{tpu_custom_call.1} parent=1 // pred_check_branch
      %112 = sbr.rel (0) target = $region53
    $region52: #{tpu_custom_call.1} parent=1 // pred_region
      _
    $region53: #{tpu_custom_call.1} parent=1 // pred_fallthru
      _
    // Predicated region
    $region54: #{tpu_custom_call.1} parent=1 // pred_check
      _
    $region55: #{tpu_custom_call.1} parent=1 // pred_check_branch
      %114 = sbr.rel (0) target = $region57
    $region56: #{tpu_custom_call.1} parent=1 // pred_region
      %115 = dma.done [#allocation4], 256
    $region57: #{tpu_custom_call.1} parent=1 // pred_fallthru
      _
    // Predicated region
    $region58: #{tpu_custom_call.1} parent=1 // pred_check
      _
    $region59: #{tpu_custom_call.1} parent=1 // pred_check_branch
      %117 = sbr.rel (0) target = $region61
    $region60: #{tpu_custom_call.1} parent=1 // pred_region
      %118 = dma.done [#allocation7], 256
    $region61: #{tpu_custom_call.1} parent=1 // pred_fallthru
      _
    // Predicated region
    $region62: #{tpu_custom_call.1} parent=1 // pred_check
      _
    $region63: #{tpu_custom_call.1} parent=1 // pred_check_branch
      %120 = sbr.rel (0) target = $region65
    $region64: #{tpu_custom_call.1} parent=1 // pred_region
      %121 = dma.done [#allocation7], 512
    $region65: #{tpu_custom_call.1} parent=1 // pred_fallthru
      _
    // Predicated region
    $region66: #{tpu_custom_call.1} parent=1 // pred_check
      _
    $region67: #{tpu_custom_call.1} parent=1 // pred_check_branch
      %123 = sbr.rel (0) target = $region69
    $region68: #{tpu_custom_call.1} parent=1 // pred_region
      %124 = dma.done [#allocation10], 16
    $region69: #{tpu_custom_call.1} parent=1 // pred_fallthru
      _
    // Predicated region
    $region70: #{tpu_custom_call.1} parent=1 // pred_check
      _
    $region71: #{tpu_custom_call.1} parent=1 // pred_check_branch
      %126 = sbr.rel (0) target = $region73
    $region72: #{tpu_custom_call.1} parent=1 // pred_region
      %127 = dma.done [#allocation10], 2048
    $region73: #{tpu_custom_call.1} parent=1 // pred_fallthru
      _
    // Predicated region
    $region74: #{tpu_custom_call.1} parent=1 // pred_check
      _
    $region75: #{tpu_custom_call.1} parent=1 // pred_check_branch
      %129 = sbr.rel (0) target = $region77
    $region76: #{tpu_custom_call.1} parent=1 // pred_region
      %130 = dma.done [#allocation13], 32
    $region77: #{tpu_custom_call.1} parent=1 // pred_fallthru
      _
    // Predicated region
    $region78: #{tpu_custom_call.1} parent=1 // pred_check
      _
    $region79: #{tpu_custom_call.1} parent=1 // pred_check_branch
      %132 = sbr.rel (0) target = $region81
    $region80: #{tpu_custom_call.1} parent=1 // pred_region
      %133 = dma.done [#allocation13], 16
    $region81: #{tpu_custom_call.1} parent=1 // pred_fallthru
      _
    %v134 = vld [vmem:[#allocation3] sm:$0xff]
    %v135 = vld [vmem:[#allocation3 + $0x8] sm:$0xff]
    %v136 = vld [vmem:[#allocation8] sm:$0xff]
    %v137 = vld [vmem:[#allocation8 + $0x8] sm:$0xff]
    %v138 = vld [vmem:[#allocation8 + $0x10] sm:$0xff]
    %v139 = vld [vmem:[#allocation8 + $0x18] sm:$0xff]
    %v140 = vld [vmem:[#allocation9] sm:$0x1]
    %v142 = vlaneseq
    %v143 = vshrl.u32 %v142, 7
    %v144 = vsub.s32 0, %v143
    %v145 = vrot.slane %v140, %v144
    %vm147 = vcmask 261120
    %v149 = vsel %vm147, %v134, 0
    %v152 = vsel %vm147, %v135, 0
    %154 = vmatprep.subr.mxu0 0.0
    %155 = vmatpush1.msra.mxu0 %v136
    %156 = vmatprep.subr.mxu0 0.0
    %157 = vmatpush1.msra.mxu0 %v137
    %158 = vmatprep.subr.mxu0 0.0
    %159 = vmatpush1.msra.mxu0 %v138
    %160 = vmatprep.subr.mxu0 0.0
    %161 = vmatpush1.msra.mxu0 %v139
    %162 = vmatprep.subr.mxu0 0.0
    %163 = vmatpush1.msra.mxu0 0.0
    %164 = vmatprep.subr.mxu0 0.0
    %165 = vmatpush1.msra.mxu0 0.0
    %166 = vmatprep.subr.mxu0 0.0
    %167 = vmatpush1.msra.mxu0 0.0
    %168 = vmatprep.subr.mxu0 0.0
    %169 = vmatpush1.msra.mxu0 0.0
    %170 = vmatprep.subr.mxu0 0.0
    %171 = vmatpush1.msra.mxu0 0.0
    %172 = vmatprep.subr.mxu0 0.0
    %173 = vmatpush1.msra.mxu0 0.0
    %174 = vmatprep.subr.mxu0 0.0
    %175 = vmatpush1.msra.mxu0 0.0
    %176 = vmatprep.subr.mxu0 0.0
    %177 = vmatpush1.msra.mxu0 0.0
    %178 = vmatprep.subr.mxu0 0.0
    %179 = vmatpush1.msra.mxu0 0.0
    %180 = vmatprep.subr.mxu0 0.0
    %181 = vmatpush1.msra.mxu0 0.0
    %182 = vmatprep.subr.mxu0 0.0
    %183 = vmatpush1.msra.mxu0 0.0
    %184 = vmatprep.subr.mxu0 0.0
    %185 = vmatpush1.msra.mxu0 0.0
    %186 = vmatprep.subr.mxu0 0.0
    %187 = vmatpush1.msra.mxu0 0.0
    %188 = vmatprep.subr.mxu0 0.0
    %189 = vmatpush1.msra.mxu0 0.0
    %190 = vmatprep.subr.mxu0 0.0
    %191 = vmatpush1.msra.mxu0 0.0
    %192 = vmatprep.subr.mxu0 0.0
    %193 = vmatpush1.msra.mxu0 0.0
    %194 = vmatprep.subr.mxu0 0.0
    %195 = vmatpush1.msra.mxu0 0.0
    %196 = vmatprep.subr.mxu0 0.0
    %197 = vmatpush1.msra.mxu0 0.0
    %198 = vmatprep.subr.mxu0 0.0
    %199 = vmatpush1.msra.mxu0 0.0
    %200 = vmatprep.subr.mxu0 0.0
    %201 = vmatpush1.msra.mxu0 0.0
    %202 = vmatprep.subr.mxu0 0.0
    %203 = vmatpush1.msra.mxu0 0.0
    %204 = vmatprep.subr.mxu0 0.0
    %205 = vmatpush1.msra.mxu0 0.0
    %206 = vmatprep.subr.mxu0 0.0
    %207 = vmatpush1.msra.mxu0 0.0
    %208 = vmatprep.subr.mxu0 0.0
    %209 = vmatpush1.msra.mxu0 0.0
    %210 = vmatprep.subr.mxu0 0.0
    %211 = vmatpush1.msra.mxu0 0.0
    %212 = vmatprep.subr.mxu0 0.0
    %213 = vmatpush1.msra.mxu0 0.0
    %214 = vmatprep.subr.mxu0 0.0
    %215 = vmatpush1.msra.mxu0 0.0
    %216 = vmatprep.subr.mxu0 0.0
    %217 = vmatpush1.msra.mxu0 0.0
    %218 = vmatprep.mubr.f32.mxu0 0.0
    %219 = vmatmul.mubr.f32.gmra.mrb[0].mxu0 %v149
    %v220 = vpop.f32.mrb[0].mxu0
    %v221 = vadd.f32 %v145, %v220
    %v222 = vpop.f32.mrb[0].mxu0
    %223 = vmatprep.mubr.f32.mxu0 0.0
    %224 = vmatmul.mubr.f32.gmra.mrb[0].mxu0 %v152
    %v225 = vpop.f32.mrb[0].mxu0
    %v226 = vadd.f32 %v145, %v225
    %v227 = vpop.f32.mrb[0].mxu0
    %228 = vdwg.mxu0
    %v229 = vmax.f32 %v221, 0.0
    %v230 = vmax.f32 %v226, 0.0
    %v231 = vld [vmem:[%s4] sm:$0xff]
    %v232 = vld [vmem:[%s4 + $0x8] sm:$0xff]
    %v233 = vld [vmem:[%s4 + $0x10] sm:$0xff]
    %v234 = vld [vmem:[%s4 + $0x18] sm:$0xff]
    %v235 = vld [vmem:[%s4 + $0x20] sm:$0xff]
    %v236 = vld [vmem:[%s4 + $0x28] sm:$0xff]
    %v237 = vld [vmem:[%s4 + $0x30] sm:$0xff]
    %v238 = vld [vmem:[%s4 + $0x38] sm:$0xff]
    %v239 = vld [vmem:[%s4 + $0x40] sm:$0xff]
    %v240 = vld [vmem:[%s4 + $0x48] sm:$0xff]
    %v241 = vld [vmem:[%s4 + $0x50] sm:$0xff]
    %v242 = vld [vmem:[%s4 + $0x58] sm:$0xff]
    %v243 = vld [vmem:[%s4 + $0x60] sm:$0xff]
    %v244 = vld [vmem:[%s4 + $0x68] sm:$0xff]
    %v245 = vld [vmem:[%s4 + $0x70] sm:$0xff]
    %v246 = vld [vmem:[%s4 + $0x78] sm:$0xff]
    %v247 = vld [vmem:[%s5] sm:$0x3]
    %v249 = vlaneseq
    %v250 = vshrl.u32 %v249, 7
    %v251 = vsub.s32 0, %v250
    %v252 = vrot.slane %v247, %v251
    %v253 = vlaneseq
    %v254 = vshrl.u32 %v253, 7
    %v255 = vsub.s32 1, %v254
    %v256 = vrot.slane %v247, %v255
    %vm259 = vcmask 523264
    %v261 = vsel %vm259, %v229, 0
    %v264 = vsel %vm259, %v230, 0
    %266 = vmatprep.subr.mxu0 %v232
    %267 = vmatpush1.msra.mxu0 %v231
    %268 = vmatprep.subr.mxu0 %v234
    %269 = vmatpush1.msra.mxu0 %v233
    %270 = vmatprep.subr.mxu0 %v236
    %271 = vmatpush1.msra.mxu0 %v235
    %272 = vmatprep.subr.mxu0 %v238
    %273 = vmatpush1.msra.mxu0 %v237
    %274 = vmatprep.subr.mxu0 %v240
    %275 = vmatpush1.msra.mxu0 %v239
    %276 = vmatprep.subr.mxu0 %v242
    %277 = vmatpush1.msra.mxu0 %v241
    %278 = vmatprep.subr.mxu0 %v244
    %279 = vmatpush1.msra.mxu0 %v243
    %280 = vmatprep.subr.mxu0 %v246
    %281 = vmatpush1.msra.mxu0 %v245
    %282 = vmatprep.subr.mxu0 0.0
    %283 = vmatpush1.msra.mxu0 0.0
    %284 = vmatprep.subr.mxu0 0.0
    %285 = vmatpush1.msra.mxu0 0.0
    %286 = vmatprep.subr.mxu0 0.0
    %287 = vmatpush1.msra.mxu0 0.0
    %288 = vmatprep.subr.mxu0 0.0
    %289 = vmatpush1.msra.mxu0 0.0
    %290 = vmatprep.subr.mxu0 0.0
    %291 = vmatpush1.msra.mxu0 0.0
    %292 = vmatprep.subr.mxu0 0.0
    %293 = vmatpush1.msra.mxu0 0.0
    %294 = vmatprep.subr.mxu0 0.0
    %295 = vmatpush1.msra.mxu0 0.0
    %296 = vmatprep.subr.mxu0 0.0
    %297 = vmatpush1.msra.mxu0 0.0
    %298 = vmatprep.subr.mxu0 0.0
    %299 = vmatpush1.msra.mxu0 0.0
    %300 = vmatprep.subr.mxu0 0.0
    %301 = vmatpush1.msra.mxu0 0.0
    %302 = vmatprep.subr.mxu0 0.0
    %303 = vmatpush1.msra.mxu0 0.0
    %304 = vmatprep.subr.mxu0 0.0
    %305 = vmatpush1.msra.mxu0 0.0
    %306 = vmatprep.subr.mxu0 0.0
    %307 = vmatpush1.msra.mxu0 0.0
    %308 = vmatprep.subr.mxu0 0.0
    %309 = vmatpush1.msra.mxu0 0.0
    %310 = vmatprep.subr.mxu0 0.0
    %311 = vmatpush1.msra.mxu0 0.0
    %312 = vmatprep.subr.mxu0 0.0
    %313 = vmatpush1.msra.mxu0 0.0
    %314 = vmatprep.subr.mxu0 0.0
    %315 = vmatpush1.msra.mxu0 0.0
    %316 = vmatprep.subr.mxu0 0.0
    %317 = vmatpush1.msra.mxu0 0.0
    %318 = vmatprep.subr.mxu0 0.0
    %319 = vmatpush1.msra.mxu0 0.0
    %320 = vmatprep.subr.mxu0 0.0
    %321 = vmatpush1.msra.mxu0 0.0
    %322 = vmatprep.subr.mxu0 0.0
    %323 = vmatpush1.msra.mxu0 0.0
    %324 = vmatprep.subr.mxu0 0.0
    %325 = vmatpush1.msra.mxu0 0.0
    %326 = vmatprep.subr.mxu0 0.0
    %327 = vmatpush1.msra.mxu0 0.0
    %328 = vmatprep.subr.mxu0 0.0
    %329 = vmatpush1.msra.mxu0 0.0
    %330 = vmatprep.mubr.f32.mxu0 0.0
    %331 = vmatmul.mubr.f32.gmra.mrb[0].mxu0 %v261
    %v332 = vpop.f32.mrb[0].mxu0
    %v333 = vadd.f32 %v252, %v332
    %v334 = vpop.f32.mrb[0].mxu0
    %v335 = vadd.f32 %v256, %v334
    %336 = vmatprep.mubr.f32.mxu0 0.0
    %337 = vmatmul.mubr.f32.gmra.mrb[0].mxu0 %v264
    %v338 = vpop.f32.mrb[0].mxu0
    %v339 = vadd.f32 %v252, %v338
    %v340 = vpop.f32.mrb[0].mxu0
    %v341 = vadd.f32 %v256, %v340
    %342 = vdwg.mxu0
    %v343 = vld [vmem:[#allocation11] sm:$0xff]
    %v344 = vld [vmem:[#allocation11 + $0x8] sm:$0xff]
    %v345 = vld [vmem:[#allocation11 + $0x10] sm:$0xff]
    %v346 = vld [vmem:[#allocation11 + $0x18] sm:$0xff]
    %v347 = vld [vmem:[#allocation11 + $0x20] sm:$0xff]
    %v348 = vld [vmem:[#allocation11 + $0x28] sm:$0xff]
    %v349 = vld [vmem:[#allocation11 + $0x30] sm:$0xff]
    %v350 = vld [vmem:[#allocation11 + $0x38] sm:$0xff]
    %v351 = vld [vmem:[#allocation11 + $0x40] sm:$0xff]
    %v352 = vld [vmem:[#allocation11 + $0x48] sm:$0xff]
    %v353 = vld [vmem:[#allocation11 + $0x50] sm:$0xff]
    %v354 = vld [vmem:[#allocation11 + $0x58] sm:$0xff]
    %v355 = vld [vmem:[#allocation11 + $0x60] sm:$0xff]
    %v356 = vld [vmem:[#allocation11 + $0x68] sm:$0xff]
    %v357 = vld [vmem:[#allocation11 + $0x70] sm:$0xff]
    %v358 = vld [vmem:[#allocation11 + $0x78] sm:$0xff]
    %v359 = vld [vmem:[#allocation12] sm:$0x3]
    %v361 = vlaneseq
    %v362 = vshrl.u32 %v361, 7
    %v363 = vsub.s32 0, %v362
    %v364 = vrot.slane %v359, %v363
    %v365 = vlaneseq
    %v366 = vshrl.u32 %v365, 7
    %v367 = vsub.s32 1, %v366
    %v368 = vrot.slane %v359, %v367
    %v372 = vsel %vm259, 0.0, 0
    %374 = vmatprep.subr.mxu0 %v344
    %375 = vmatpush1.msra.mxu0 %v343
    %376 = vmatprep.subr.mxu0 %v346
    %377 = vmatpush1.msra.mxu0 %v345
    %378 = vmatprep.subr.mxu0 %v348
    %379 = vmatpush1.msra.mxu0 %v347
    %380 = vmatprep.subr.mxu0 %v350
    %381 = vmatpush1.msra.mxu0 %v349
    %382 = vmatprep.subr.mxu0 %v352
    %383 = vmatpush1.msra.mxu0 %v351
    %384 = vmatprep.subr.mxu0 %v354
    %385 = vmatpush1.msra.mxu0 %v353
    %386 = vmatprep.subr.mxu0 %v356
    %387 = vmatpush1.msra.mxu0 %v355
    %388 = vmatprep.subr.mxu0 %v358
    %389 = vmatpush1.msra.mxu0 %v357
    %390 = vmatprep.subr.mxu0 0.0
    %391 = vmatpush1.msra.mxu0 0.0
    %392 = vmatprep.subr.mxu0 0.0
    %393 = vmatpush1.msra.mxu0 0.0
    %394 = vmatprep.subr.mxu0 0.0
    %395 = vmatpush1.msra.mxu0 0.0
    %396 = vmatprep.subr.mxu0 0.0
    %397 = vmatpush1.msra.mxu0 0.0
    %398 = vmatprep.subr.mxu0 0.0
    %399 = vmatpush1.msra.mxu0 0.0
    %400 = vmatprep.subr.mxu0 0.0
    %401 = vmatpush1.msra.mxu0 0.0
    %402 = vmatprep.subr.mxu0 0.0
    %403 = vmatpush1.msra.mxu0 0.0
    %404 = vmatprep.subr.mxu0 0.0
    %405 = vmatpush1.msra.mxu0 0.0
    %406 = vmatprep.subr.mxu0 0.0
    %407 = vmatpush1.msra.mxu0 0.0
    %408 = vmatprep.subr.mxu0 0.0
    %409 = vmatpush1.msra.mxu0 0.0
    %410 = vmatprep.subr.mxu0 0.0
    %411 = vmatpush1.msra.mxu0 0.0
    %412 = vmatprep.subr.mxu0 0.0
    %413 = vmatpush1.msra.mxu0 0.0
    %414 = vmatprep.subr.mxu0 0.0
    %415 = vmatpush1.msra.mxu0 0.0
    %416 = vmatprep.subr.mxu0 0.0
    %417 = vmatpush1.msra.mxu0 0.0
    %418 = vmatprep.subr.mxu0 0.0
    %419 = vmatpush1.msra.mxu0 0.0
    %420 = vmatprep.subr.mxu0 0.0
    %421 = vmatpush1.msra.mxu0 0.0
    %422 = vmatprep.subr.mxu0 0.0
    %423 = vmatpush1.msra.mxu0 0.0
    %424 = vmatprep.subr.mxu0 0.0
    %425 = vmatpush1.msra.mxu0 0.0
    %426 = vmatprep.subr.mxu0 0.0
    %427 = vmatpush1.msra.mxu0 0.0
    %428 = vmatprep.subr.mxu0 0.0
    %429 = vmatpush1.msra.mxu0 0.0
    %430 = vmatprep.subr.mxu0 0.0
    %431 = vmatpush1.msra.mxu0 0.0
    %432 = vmatprep.subr.mxu0 0.0
    %433 = vmatpush1.msra.mxu0 0.0
    %434 = vmatprep.subr.mxu0 0.0
    %435 = vmatpush1.msra.mxu0 0.0
    %436 = vmatprep.subr.mxu0 0.0
    %437 = vmatpush1.msra.mxu0 0.0
    %438 = vmatprep.mubr.f32.mxu0 0.0
    %439 = vmatmul.mubr.f32.gmra.mrb[0].mxu0 %v372
    %v440 = vpop.f32.mrb[0].mxu0
    %v441 = vadd.f32 %v364, %v440
    %v442 = vpop.f32.mrb[0].mxu0
    %v443 = vadd.f32 %v368, %v442
    %444 = vdwg.mxu0
    %v445 = vadd.f32 %v333, %v441
    %v446 = vxor.u32 %v445, 2147483648
    %v447 = vmul.f32 %v446, 1.442695
    %v448 = vpow.pop %v447
    %v449 = vadd.f32 %v448, 1.0
    %v450 = vrcp.pop %v449
    %v451 = vmul.f32 1.0, %v450
    %v452 = vmul.f32 %v451, %v443
    %v453 = vadd.f32 %v335, %v452
    %v454 = vtanh.pop %v453
    %v455 = vsub.f32 1.0, %v451
    %457 = vrot.lane.b32.xlu0 %v454, 64
    %v458 = vpop.permute.xlu0 %457
    %v460 = vmul.f32 %v455, %v458
    %v461 = vmul.f32 %v451, 0.0
    %v462 = vadd.f32 %v460, %v461
    %464 = vrot.lane.b32.xlu0 %v462, 64
    %v465 = vpop.permute.xlu0 %464
    %vm467 = vcmask 517120
    %468 = vst.msk [vmem:[#allocation2] sm:$0x3] %vm467, %v465
    %v469 = vsel %vm259, %v465, 0
    %471 = vmatprep.subr.mxu0 %v344
    %472 = vmatpush1.msra.mxu0 %v343
    %473 = vmatprep.subr.mxu0 %v346
    %474 = vmatpush1.msra.mxu0 %v345
    %475 = vmatprep.subr.mxu0 %v348
    %476 = vmatpush1.msra.mxu0 %v347
    %477 = vmatprep.subr.mxu0 %v350
    %478 = vmatpush1.msra.mxu0 %v349
    %479 = vmatprep.subr.mxu0 %v352
    %480 = vmatpush1.msra.mxu0 %v351
    %481 = vmatprep.subr.mxu0 %v354
    %482 = vmatpush1.msra.mxu0 %v353
    %483 = vmatprep.subr.mxu0 %v356
    %484 = vmatpush1.msra.mxu0 %v355
    %485 = vmatprep.subr.mxu0 %v358
    %486 = vmatpush1.msra.mxu0 %v357
    %487 = vmatprep.subr.mxu0 0.0
    %488 = vmatpush1.msra.mxu0 0.0
    %489 = vmatprep.subr.mxu0 0.0
    %490 = vmatpush1.msra.mxu0 0.0
    %491 = vmatprep.subr.mxu0 0.0
    %492 = vmatpush1.msra.mxu0 0.0
    %493 = vmatprep.subr.mxu0 0.0
    %494 = vmatpush1.msra.mxu0 0.0
    %495 = vmatprep.subr.mxu0 0.0
    %496 = vmatpush1.msra.mxu0 0.0
    %497 = vmatprep.subr.mxu0 0.0
    %498 = vmatpush1.msra.mxu0 0.0
    %499 = vmatprep.subr.mxu0 0.0
    %500 = vmatpush1.msra.mxu0 0.0
    %501 = vmatprep.subr.mxu0 0.0
    %502 = vmatpush1.msra.mxu0 0.0
    %503 = vmatprep.subr.mxu0 0.0
    %504 = vmatpush1.msra.mxu0 0.0
    %505 = vmatprep.subr.mxu0 0.0
    %506 = vmatpush1.msra.mxu0 0.0
    %507 = vmatprep.subr.mxu0 0.0
    %508 = vmatpush1.msra.mxu0 0.0
    %509 = vmatprep.subr.mxu0 0.0
    %510 = vmatpush1.msra.mxu0 0.0
    %511 = vmatprep.subr.mxu0 0.0
    %512 = vmatpush1.msra.mxu0 0.0
    %513 = vmatprep.subr.mxu0 0.0
    %514 = vmatpush1.msra.mxu0 0.0
    %515 = vmatprep.subr.mxu0 0.0
    %516 = vmatpush1.msra.mxu0 0.0
    %517 = vmatprep.subr.mxu0 0.0
    %518 = vmatpush1.msra.mxu0 0.0
    %519 = vmatprep.subr.mxu0 0.0
    %520 = vmatpush1.msra.mxu0 0.0
    %521 = vmatprep.subr.mxu0 0.0
    %522 = vmatpush1.msra.mxu0 0.0
    %523 = vmatprep.subr.mxu0 0.0
    %524 = vmatpush1.msra.mxu0 0.0
    %525 = vmatprep.subr.mxu0 0.0
    %526 = vmatpush1.msra.mxu0 0.0
    %527 = vmatprep.subr.mxu0 0.0
    %528 = vmatpush1.msra.mxu0 0.0
    %529 = vmatprep.subr.mxu0 0.0
    %530 = vmatpush1.msra.mxu0 0.0
    %531 = vmatprep.subr.mxu0 0.0
    %532 = vmatpush1.msra.mxu0 0.0
    %533 = vmatprep.subr.mxu0 0.0
    %534 = vmatpush1.msra.mxu0 0.0
    %535 = vmatprep.mubr.f32.mxu0 0.0
    %536 = vmatmul.mubr.f32.gmra.mrb[0].mxu0 %v469
    %v537 = vpop.f32.mrb[0].mxu0
    %v538 = vadd.f32 %v364, %v537
    %v539 = vpop.f32.mrb[0].mxu0
    %v540 = vadd.f32 %v368, %v539
    %541 = vdwg.mxu0
    %v543 = vrot.slane %v538, 6
    %v545 = vadd.f32 %v333, %v543
    %v546 = vxor.u32 %v545, 2147483648
    %v547 = vmul.f32 %v546, 1.442695
    %v548 = vpow.pop %v547
    %v549 = vadd.f32 %v548, 1.0
    %v550 = vrcp.pop %v549
    %v551 = vmul.f32 1.0, %v550
    %v553 = vrot.slane %v540, 6
    %v555 = vmul.f32 %v551, %v553
    %v556 = vadd.f32 %v335, %v555
    %v557 = vtanh.pop %v556
    %v558 = vsub.f32 1.0, %v551
    %560 = vrot.lane.b32.xlu0 %v557, 64
    %v561 = vpop.permute.xlu0 %560
    %v563 = vmul.f32 %v558, %v561
    %v564 = vrot.slane %v462, 6
    %v566 = vmul.f32 %v551, %v564
    %v567 = vadd.f32 %v563, %v566
    %569 = vrot.lane.b32.xlu0 %v567, 64
    %v570 = vpop.permute.xlu0 %569
    %vm572 = vcmask 519170
    %573 = vst.msk [vmem:[#allocation2] sm:$0xc] %vm572, %v570
    %v574 = vrot.slane %v567, 2
    %575 = vrot.lane.b32.xlu0 %v574, 64
    %v576 = vpop.permute.xlu0 %575
    %v577 = vsel %vm259, %v576, 0
    %579 = vmatprep.subr.mxu0 %v344
    %580 = vmatpush1.msra.mxu0 %v343
    %581 = vmatprep.subr.mxu0 %v346
    %582 = vmatpush1.msra.mxu0 %v345
    %583 = vmatprep.subr.mxu0 %v348
    %584 = vmatpush1.msra.mxu0 %v347
    %585 = vmatprep.subr.mxu0 %v350
    %586 = vmatpush1.msra.mxu0 %v349
    %587 = vmatprep.subr.mxu0 %v352
    %588 = vmatpush1.msra.mxu0 %v351
    %589 = vmatprep.subr.mxu0 %v354
    %590 = vmatpush1.msra.mxu0 %v353
    %591 = vmatprep.subr.mxu0 %v356
    %592 = vmatpush1.msra.mxu0 %v355
    %593 = vmatprep.subr.mxu0 %v358
    %594 = vmatpush1.msra.mxu0 %v357
    %595 = vmatprep.subr.mxu0 0.0
    %596 = vmatpush1.msra.mxu0 0.0
    %597 = vmatprep.subr.mxu0 0.0
    %598 = vmatpush1.msra.mxu0 0.0
    %599 = vmatprep.subr.mxu0 0.0
    %600 = vmatpush1.msra.mxu0 0.0
    %601 = vmatprep.subr.mxu0 0.0
    %602 = vmatpush1.msra.mxu0 0.0
    %603 = vmatprep.subr.mxu0 0.0
    %604 = vmatpush1.msra.mxu0 0.0
    %605 = vmatprep.subr.mxu0 0.0
    %606 = vmatpush1.msra.mxu0 0.0
    %607 = vmatprep.subr.mxu0 0.0
    %608 = vmatpush1.msra.mxu0 0.0
    %609 = vmatprep.subr.mxu0 0.0
    %610 = vmatpush1.msra.mxu0 0.0
    %611 = vmatprep.subr.mxu0 0.0
    %612 = vmatpush1.msra.mxu0 0.0
    %613 = vmatprep.subr.mxu0 0.0
    %614 = vmatpush1.msra.mxu0 0.0
    %615 = vmatprep.subr.mxu0 0.0
    %616 = vmatpush1.msra.mxu0 0.0
    %617 = vmatprep.subr.mxu0 0.0
    %618 = vmatpush1.msra.mxu0 0.0
    %619 = vmatprep.subr.mxu0 0.0
    %620 = vmatpush1.msra.mxu0 0.0
    %621 = vmatprep.subr.mxu0 0.0
    %622 = vmatpush1.msra.mxu0 0.0
    %623 = vmatprep.subr.mxu0 0.0
    %624 = vmatpush1.msra.mxu0 0.0
    %625 = vmatprep.subr.mxu0 0.0
    %626 = vmatpush1.msra.mxu0 0.0
    %627 = vmatprep.subr.mxu0 0.0
    %628 = vmatpush1.msra.mxu0 0.0
    %629 = vmatprep.subr.mxu0 0.0
    %630 = vmatpush1.msra.mxu0 0.0
    %631 = vmatprep.subr.mxu0 0.0
    %632 = vmatpush1.msra.mxu0 0.0
    %633 = vmatprep.subr.mxu0 0.0
    %634 = vmatpush1.msra.mxu0 0.0
    %635 = vmatprep.subr.mxu0 0.0
    %636 = vmatpush1.msra.mxu0 0.0
    %637 = vmatprep.subr.mxu0 0.0
    %638 = vmatpush1.msra.mxu0 0.0
    %639 = vmatprep.subr.mxu0 0.0
    %640 = vmatpush1.msra.mxu0 0.0
    %641 = vmatprep.subr.mxu0 0.0
    %642 = vmatpush1.msra.mxu0 0.0
    %643 = vmatprep.mubr.f32.mxu0 0.0
    %644 = vmatmul.mubr.f32.gmra.mrb[0].mxu0 %v577
    %v645 = vpop.f32.mrb[0].mxu0
    %v646 = vadd.f32 %v364, %v645
    %v647 = vpop.f32.mrb[0].mxu0
    %v648 = vadd.f32 %v368, %v647
    %649 = vdwg.mxu0
    %v651 = vrot.slane %v646, 4
    %v653 = vadd.f32 %v333, %v651
    %v654 = vxor.u32 %v653, 2147483648
    %v655 = vmul.f32 %v654, 1.442695
    %v656 = vpow.pop %v655
    %v657 = vadd.f32 %v656, 1.0
    %v658 = vrcp.pop %v657
    %v659 = vmul.f32 1.0, %v658
    %v661 = vrot.slane %v648, 4
    %v663 = vmul.f32 %v659, %v661
    %v664 = vadd.f32 %v335, %v663
    %v665 = vtanh.pop %v664
    %v666 = vsub.f32 1.0, %v659
    %668 = vrot.lane.b32.xlu0 %v665, 64
    %v669 = vpop.permute.xlu0 %668
    %v671 = vmul.f32 %v666, %v669
    %v672 = vrot.slane %v567, 6
    %v674 = vmul.f32 %v659, %v672
    %v675 = vadd.f32 %v671, %v674
    %677 = vrot.lane.b32.xlu0 %v675, 64
    %v678 = vpop.permute.xlu0 %677
    %vm680 = vcmask 521220
    %681 = vst.msk [vmem:[#allocation2] sm:$0x30] %vm680, %v678
    %v682 = vrot.slane %v675, 4
    %683 = vrot.lane.b32.xlu0 %v682, 64
    %v684 = vpop.permute.xlu0 %683
    %v685 = vsel %vm259, %v684, 0
    %687 = vmatprep.subr.mxu0 %v344
    %688 = vmatpush1.msra.mxu0 %v343
    %689 = vmatprep.subr.mxu0 %v346
    %690 = vmatpush1.msra.mxu0 %v345
    %691 = vmatprep.subr.mxu0 %v348
    %692 = vmatpush1.msra.mxu0 %v347
    %693 = vmatprep.subr.mxu0 %v350
    %694 = vmatpush1.msra.mxu0 %v349
    %695 = vmatprep.subr.mxu0 %v352
    %696 = vmatpush1.msra.mxu0 %v351
    %697 = vmatprep.subr.mxu0 %v354
    %698 = vmatpush1.msra.mxu0 %v353
    %699 = vmatprep.subr.mxu0 %v356
    %700 = vmatpush1.msra.mxu0 %v355
    %701 = vmatprep.subr.mxu0 %v358
    %702 = vmatpush1.msra.mxu0 %v357
    %703 = vmatprep.subr.mxu0 0.0
    %704 = vmatpush1.msra.mxu0 0.0
    %705 = vmatprep.subr.mxu0 0.0
    %706 = vmatpush1.msra.mxu0 0.0
    %707 = vmatprep.subr.mxu0 0.0
    %708 = vmatpush1.msra.mxu0 0.0
    %709 = vmatprep.subr.mxu0 0.0
    %710 = vmatpush1.msra.mxu0 0.0
    %711 = vmatprep.subr.mxu0 0.0
    %712 = vmatpush1.msra.mxu0 0.0
    %713 = vmatprep.subr.mxu0 0.0
    %714 = vmatpush1.msra.mxu0 0.0
    %715 = vmatprep.subr.mxu0 0.0
    %716 = vmatpush1.msra.mxu0 0.0
    %717 = vmatprep.subr.mxu0 0.0
    %718 = vmatpush1.msra.mxu0 0.0
    %719 = vmatprep.subr.mxu0 0.0
    %720 = vmatpush1.msra.mxu0 0.0
    %721 = vmatprep.subr.mxu0 0.0
    %722 = vmatpush1.msra.mxu0 0.0
    %723 = vmatprep.subr.mxu0 0.0
    %724 = vmatpush1.msra.mxu0 0.0
    %725 = vmatprep.subr.mxu0 0.0
    %726 = vmatpush1.msra.mxu0 0.0
    %727 = vmatprep.subr.mxu0 0.0
    %728 = vmatpush1.msra.mxu0 0.0
    %729 = vmatprep.subr.mxu0 0.0
    %730 = vmatpush1.msra.mxu0 0.0
    %731 = vmatprep.subr.mxu0 0.0
    %732 = vmatpush1.msra.mxu0 0.0
    %733 = vmatprep.subr.mxu0 0.0
    %734 = vmatpush1.msra.mxu0 0.0
    %735 = vmatprep.subr.mxu0 0.0
    %736 = vmatpush1.msra.mxu0 0.0
    %737 = vmatprep.subr.mxu0 0.0
    %738 = vmatpush1.msra.mxu0 0.0
    %739 = vmatprep.subr.mxu0 0.0
    %740 = vmatpush1.msra.mxu0 0.0
    %741 = vmatprep.subr.mxu0 0.0
    %742 = vmatpush1.msra.mxu0 0.0
    %743 = vmatprep.subr.mxu0 0.0
    %744 = vmatpush1.msra.mxu0 0.0
    %745 = vmatprep.subr.mxu0 0.0
    %746 = vmatpush1.msra.mxu0 0.0
    %747 = vmatprep.subr.mxu0 0.0
    %748 = vmatpush1.msra.mxu0 0.0
    %749 = vmatprep.subr.mxu0 0.0
    %750 = vmatpush1.msra.mxu0 0.0
    %751 = vmatprep.mubr.f32.mxu0 0.0
    %752 = vmatmul.mubr.f32.gmra.mrb[0].mxu0 %v685
    %v753 = vpop.f32.mrb[0].mxu0
    %v754 = vadd.f32 %v364, %v753
    %v755 = vpop.f32.mrb[0].mxu0
    %v756 = vadd.f32 %v368, %v755
    %757 = vdwg.mxu0
    %v759 = vrot.slane %v754, 2
    %v761 = vadd.f32 %v333, %v759
    %v762 = vxor.u32 %v761, 2147483648
    %v763 = vmul.f32 %v762, 1.442695
    %v764 = vpow.pop %v763
    %v765 = vadd.f32 %v764, 1.0
    %v766 = vrcp.pop %v765
    %v767 = vmul.f32 1.0, %v766
    %v769 = vrot.slane %v756, 2
    %v771 = vmul.f32 %v767, %v769
    %v772 = vadd.f32 %v335, %v771
    %v773 = vtanh.pop %v772
    %v774 = vsub.f32 1.0, %v767
    %776 = vrot.lane.b32.xlu0 %v773, 64
    %v777 = vpop.permute.xlu0 %776
    %v779 = vmul.f32 %v774, %v777
    %v780 = vrot.slane %v675, 6
    %v782 = vmul.f32 %v767, %v780
    %v783 = vadd.f32 %v779, %v782
    %785 = vrot.lane.b32.xlu0 %v783, 64
    %v786 = vpop.permute.xlu0 %785
    %vm788 = vcmask 523270
    %789 = vst.msk [vmem:[#allocation2] sm:$0xc0] %vm788, %v786
    %v790 = vrot.slane %v783, 6
    %791 = vrot.lane.b32.xlu0 %v790, 64
    %v792 = vpop.permute.xlu0 %791
    %v793 = vsel %vm259, %v792, 0
    %795 = vmatprep.subr.mxu0 %v344
    %796 = vmatpush1.msra.mxu0 %v343
    %797 = vmatprep.subr.mxu0 %v346
    %798 = vmatpush1.msra.mxu0 %v345
    %799 = vmatprep.subr.mxu0 %v348
    %800 = vmatpush1.msra.mxu0 %v347
    %801 = vmatprep.subr.mxu0 %v350
    %802 = vmatpush1.msra.mxu0 %v349
    %803 = vmatprep.subr.mxu0 %v352
    %804 = vmatpush1.msra.mxu0 %v351
    %805 = vmatprep.subr.mxu0 %v354
    %806 = vmatpush1.msra.mxu0 %v353
    %807 = vmatprep.subr.mxu0 %v356
    %808 = vmatpush1.msra.mxu0 %v355
    %809 = vmatprep.subr.mxu0 %v358
    %810 = vmatpush1.msra.mxu0 %v357
    %811 = vmatprep.subr.mxu0 0.0
    %812 = vmatpush1.msra.mxu0 0.0
    %813 = vmatprep.subr.mxu0 0.0
    %814 = vmatpush1.msra.mxu0 0.0
    %815 = vmatprep.subr.mxu0 0.0
    %816 = vmatpush1.msra.mxu0 0.0
    %817 = vmatprep.subr.mxu0 0.0
    %818 = vmatpush1.msra.mxu0 0.0
    %819 = vmatprep.subr.mxu0 0.0
    %820 = vmatpush1.msra.mxu0 0.0
    %821 = vmatprep.subr.mxu0 0.0
    %822 = vmatpush1.msra.mxu0 0.0
    %823 = vmatprep.subr.mxu0 0.0
    %824 = vmatpush1.msra.mxu0 0.0
    %825 = vmatprep.subr.mxu0 0.0
    %826 = vmatpush1.msra.mxu0 0.0
    %827 = vmatprep.subr.mxu0 0.0
    %828 = vmatpush1.msra.mxu0 0.0
    %829 = vmatprep.subr.mxu0 0.0
    %830 = vmatpush1.msra.mxu0 0.0
    %831 = vmatprep.subr.mxu0 0.0
    %832 = vmatpush1.msra.mxu0 0.0
    %833 = vmatprep.subr.mxu0 0.0
    %834 = vmatpush1.msra.mxu0 0.0
    %835 = vmatprep.subr.mxu0 0.0
    %836 = vmatpush1.msra.mxu0 0.0
    %837 = vmatprep.subr.mxu0 0.0
    %838 = vmatpush1.msra.mxu0 0.0
    %839 = vmatprep.subr.mxu0 0.0
    %840 = vmatpush1.msra.mxu0 0.0
    %841 = vmatprep.subr.mxu0 0.0
    %842 = vmatpush1.msra.mxu0 0.0
    %843 = vmatprep.subr.mxu0 0.0
    %844 = vmatpush1.msra.mxu0 0.0
    %845 = vmatprep.subr.mxu0 0.0
    %846 = vmatpush1.msra.mxu0 0.0
    %847 = vmatprep.subr.mxu0 0.0
    %848 = vmatpush1.msra.mxu0 0.0
    %849 = vmatprep.subr.mxu0 0.0
    %850 = vmatpush1.msra.mxu0 0.0
    %851 = vmatprep.subr.mxu0 0.0
    %852 = vmatpush1.msra.mxu0 0.0
    %853 = vmatprep.subr.mxu0 0.0
    %854 = vmatpush1.msra.mxu0 0.0
    %855 = vmatprep.subr.mxu0 0.0
    %856 = vmatpush1.msra.mxu0 0.0
    %857 = vmatprep.subr.mxu0 0.0
    %858 = vmatpush1.msra.mxu0 0.0
    %859 = vmatprep.mubr.f32.mxu0 0.0
    %860 = vmatmul.mubr.f32.gmra.mrb[0].mxu0 %v793
    %v861 = vpop.f32.mrb[0].mxu0
    %v862 = vadd.f32 %v364, %v861
    %v863 = vpop.f32.mrb[0].mxu0
    %v864 = vadd.f32 %v368, %v863
    %865 = vdwg.mxu0
    %v866 = vadd.f32 %v339, %v862
    %v867 = vxor.u32 %v866, 2147483648
    %v868 = vmul.f32 %v867, 1.442695
    %v869 = vpow.pop %v868
    %v870 = vadd.f32 %v869, 1.0
    %v871 = vrcp.pop %v870
    %v872 = vmul.f32 1.0, %v871
    %v873 = vmul.f32 %v872, %v864
    %v874 = vadd.f32 %v341, %v873
    %v875 = vtanh.pop %v874
    %v876 = vsub.f32 1.0, %v872
    %878 = vrot.lane.b32.xlu0 %v875, 64
    %v879 = vpop.permute.xlu0 %878
    %v881 = vmul.f32 %v876, %v879
    %v883 = vmul.f32 %v872, %v790
    %v884 = vadd.f32 %v881, %v883
    %886 = vrot.lane.b32.xlu0 %v884, 64
    %v887 = vpop.permute.xlu0 %886
    %889 = vst.msk [vmem:[#allocation2 + $0x8] sm:$0x3] %vm467, %v887
    %v890 = vsel %vm259, %v887, 0
    %892 = vmatprep.subr.mxu0 %v344
    %893 = vmatpush1.msra.mxu0 %v343
    %894 = vmatprep.subr.mxu0 %v346
    %895 = vmatpush1.msra.mxu0 %v345
    %896 = vmatprep.subr.mxu0 %v348
    %897 = vmatpush1.msra.mxu0 %v347
    %898 = vmatprep.subr.mxu0 %v350
    %899 = vmatpush1.msra.mxu0 %v349
    %900 = vmatprep.subr.mxu0 %v352
    %901 = vmatpush1.msra.mxu0 %v351
    %902 = vmatprep.subr.mxu0 %v354
    %903 = vmatpush1.msra.mxu0 %v353
    %904 = vmatprep.subr.mxu0 %v356
    %905 = vmatpush1.msra.mxu0 %v355
    %906 = vmatprep.subr.mxu0 %v358
    %907 = vmatpush1.msra.mxu0 %v357
    %908 = vmatprep.subr.mxu0 0.0
    %909 = vmatpush1.msra.mxu0 0.0
    %910 = vmatprep.subr.mxu0 0.0
    %911 = vmatpush1.msra.mxu0 0.0
    %912 = vmatprep.subr.mxu0 0.0
    %913 = vmatpush1.msra.mxu0 0.0
    %914 = vmatprep.subr.mxu0 0.0
    %915 = vmatpush1.msra.mxu0 0.0
    %916 = vmatprep.subr.mxu0 0.0
    %917 = vmatpush1.msra.mxu0 0.0
    %918 = vmatprep.subr.mxu0 0.0
    %919 = vmatpush1.msra.mxu0 0.0
    %920 = vmatprep.subr.mxu0 0.0
    %921 = vmatpush1.msra.mxu0 0.0
    %922 = vmatprep.subr.mxu0 0.0
    %923 = vmatpush1.msra.mxu0 0.0
    %924 = vmatprep.subr.mxu0 0.0
    %925 = vmatpush1.msra.mxu0 0.0
    %926 = vmatprep.subr.mxu0 0.0
    %927 = vmatpush1.msra.mxu0 0.0
    %928 = vmatprep.subr.mxu0 0.0
    %929 = vmatpush1.msra.mxu0 0.0
    %930 = vmatprep.subr.mxu0 0.0
    %931 = vmatpush1.msra.mxu0 0.0
    %932 = vmatprep.subr.mxu0 0.0
    %933 = vmatpush1.msra.mxu0 0.0
    %934 = vmatprep.subr.mxu0 0.0
    %935 = vmatpush1.msra.mxu0 0.0
    %936 = vmatprep.subr.mxu0 0.0
    %937 = vmatpush1.msra.mxu0 0.0
    %938 = vmatprep.subr.mxu0 0.0
    %939 = vmatpush1.msra.mxu0 0.0
    %940 = vmatprep.subr.mxu0 0.0
    %941 = vmatpush1.msra.mxu0 0.0
    %942 = vmatprep.subr.mxu0 0.0
    %943 = vmatpush1.msra.mxu0 0.0
    %944 = vmatprep.subr.mxu0 0.0
    %945 = vmatpush1.msra.mxu0 0.0
    %946 = vmatprep.subr.mxu0 0.0
    %947 = vmatpush1.msra.mxu0 0.0
    %948 = vmatprep.subr.mxu0 0.0
    %949 = vmatpush1.msra.mxu0 0.0
    %950 = vmatprep.subr.mxu0 0.0
    %951 = vmatpush1.msra.mxu0 0.0
    %952 = vmatprep.subr.mxu0 0.0
    %953 = vmatpush1.msra.mxu0 0.0
    %954 = vmatprep.subr.mxu0 0.0
    %955 = vmatpush1.msra.mxu0 0.0
    %956 = vmatprep.mubr.f32.mxu0 0.0
    %957 = vmatmul.mubr.f32.gmra.mrb[0].mxu0 %v890
    %v958 = vpop.f32.mrb[0].mxu0
    %v959 = vadd.f32 %v364, %v958
    %v960 = vpop.f32.mrb[0].mxu0
    %v961 = vadd.f32 %v368, %v960
    %962 = vdwg.mxu0
    %v964 = vrot.slane %v959, 6
    %v966 = vadd.f32 %v339, %v964
    %v967 = vxor.u32 %v966, 2147483648
    %v968 = vmul.f32 %v967, 1.442695
    %v969 = vpow.pop %v968
    %v970 = vadd.f32 %v969, 1.0
    %v971 = vrcp.pop %v970
    %v972 = vmul.f32 1.0, %v971
    %v974 = vrot.slane %v961, 6
    %v976 = vmul.f32 %v972, %v974
    %v977 = vadd.f32 %v341, %v976
    %v978 = vtanh.pop %v977
    %v979 = vsub.f32 1.0, %v972
    %981 = vrot.lane.b32.xlu0 %v978, 64
    %v982 = vpop.permute.xlu0 %981
    %v984 = vmul.f32 %v979, %v982
    %v985 = vrot.slane %v884, 6
    %v987 = vmul.f32 %v972, %v985
    %v988 = vadd.f32 %v984, %v987
    %990 = vrot.lane.b32.xlu0 %v988, 64
    %v991 = vpop.permute.xlu0 %990
    %993 = vst.msk [vmem:[#allocation2 + $0x8] sm:$0xc] %vm572, %v991
    %v994 = vrot.slane %v988, 2
    %995 = vrot.lane.b32.xlu0 %v994, 64
    %v996 = vpop.permute.xlu0 %995
    %v997 = vsel %vm259, %v996, 0
    %999 = vmatprep.subr.mxu0 %v344
    %1000 = vmatpush1.msra.mxu0 %v343
    %1001 = vmatprep.subr.mxu0 %v346
    %1002 = vmatpush1.msra.mxu0 %v345
    %1003 = vmatprep.subr.mxu0 %v348
    %1004 = vmatpush1.msra.mxu0 %v347
    %1005 = vmatprep.subr.mxu0 %v350
    %1006 = vmatpush1.msra.mxu0 %v349
    %1007 = vmatprep.subr.mxu0 %v352
    %1008 = vmatpush1.msra.mxu0 %v351
    %1009 = vmatprep.subr.mxu0 %v354
    %1010 = vmatpush1.msra.mxu0 %v353
    %1011 = vmatprep.subr.mxu0 %v356
    %1012 = vmatpush1.msra.mxu0 %v355
    %1013 = vmatprep.subr.mxu0 %v358
    %1014 = vmatpush1.msra.mxu0 %v357
    %1015 = vmatprep.subr.mxu0 0.0
    %1016 = vmatpush1.msra.mxu0 0.0
    %1017 = vmatprep.subr.mxu0 0.0
    %1018 = vmatpush1.msra.mxu0 0.0
    %1019 = vmatprep.subr.mxu0 0.0
    %1020 = vmatpush1.msra.mxu0 0.0
    %1021 = vmatprep.subr.mxu0 0.0
    %1022 = vmatpush1.msra.mxu0 0.0
    %1023 = vmatprep.subr.mxu0 0.0
    %1024 = vmatpush1.msra.mxu0 0.0
    %1025 = vmatprep.subr.mxu0 0.0
    %1026 = vmatpush1.msra.mxu0 0.0
    %1027 = vmatprep.subr.mxu0 0.0
    %1028 = vmatpush1.msra.mxu0 0.0
    %1029 = vmatprep.subr.mxu0 0.0
    %1030 = vmatpush1.msra.mxu0 0.0
    %1031 = vmatprep.subr.mxu0 0.0
    %1032 = vmatpush1.msra.mxu0 0.0
    %1033 = vmatprep.subr.mxu0 0.0
    %1034 = vmatpush1.msra.mxu0 0.0
    %1035 = vmatprep.subr.mxu0 0.0
    %1036 = vmatpush1.msra.mxu0 0.0
    %1037 = vmatprep.subr.mxu0 0.0
    %1038 = vmatpush1.msra.mxu0 0.0
    %1039 = vmatprep.subr.mxu0 0.0
    %1040 = vmatpush1.msra.mxu0 0.0
    %1041 = vmatprep.subr.mxu0 0.0
    %1042 = vmatpush1.msra.mxu0 0.0
    %1043 = vmatprep.subr.mxu0 0.0
    %1044 = vmatpush1.msra.mxu0 0.0
    %1045 = vmatprep.subr.mxu0 0.0
    %1046 = vmatpush1.msra.mxu0 0.0
    %1047 = vmatprep.subr.mxu0 0.0
    %1048 = vmatpush1.msra.mxu0 0.0
    %1049 = vmatprep.subr.mxu0 0.0
    %1050 = vmatpush1.msra.mxu0 0.0
    %1051 = vmatprep.subr.mxu0 0.0
    %1052 = vmatpush1.msra.mxu0 0.0
    %1053 = vmatprep.subr.mxu0 0.0
    %1054 = vmatpush1.msra.mxu0 0.0
    %1055 = vmatprep.subr.mxu0 0.0
    %1056 = vmatpush1.msra.mxu0 0.0
    %1057 = vmatprep.subr.mxu0 0.0
    %1058 = vmatpush1.msra.mxu0 0.0
    %1059 = vmatprep.subr.mxu0 0.0
    %1060 = vmatpush1.msra.mxu0 0.0
    %1061 = vmatprep.subr.mxu0 0.0
    %1062 = vmatpush1.msra.mxu0 0.0
    %1063 = vmatprep.mubr.f32.mxu0 0.0
    %1064 = vmatmul.mubr.f32.gmra.mrb[0].mxu0 %v997
    %v1065 = vpop.f32.mrb[0].mxu0
    %v1066 = vadd.f32 %v364, %v1065
    %v1067 = vpop.f32.mrb[0].mxu0
    %v1068 = vadd.f32 %v368, %v1067
    %1069 = vdwg.mxu0
    %v1071 = vrot.slane %v1066, 4
    %v1073 = vadd.f32 %v339, %v1071
    %v1074 = vxor.u32 %v1073, 2147483648
    %v1075 = vmul.f32 %v1074, 1.442695
    %v1076 = vpow.pop %v1075
    %v1077 = vadd.f32 %v1076, 1.0
    %v1078 = vrcp.pop %v1077
    %v1079 = vmul.f32 1.0, %v1078
    %v1081 = vrot.slane %v1068, 4
    %v1083 = vmul.f32 %v1079, %v1081
    %v1084 = vadd.f32 %v341, %v1083
    %v1085 = vtanh.pop %v1084
    %v1086 = vsub.f32 1.0, %v1079
    %1088 = vrot.lane.b32.xlu0 %v1085, 64
    %v1089 = vpop.permute.xlu0 %1088
    %v1091 = vmul.f32 %v1086, %v1089
    %v1092 = vrot.slane %v988, 6
    %v1094 = vmul.f32 %v1079, %v1092
    %v1095 = vadd.f32 %v1091, %v1094
    %1097 = vrot.lane.b32.xlu0 %v1095, 64
    %v1098 = vpop.permute.xlu0 %1097
    %1100 = vst.msk [vmem:[#allocation2 + $0x8] sm:$0x30] %vm680, %v1098
    %v1101 = vrot.slane %v1095, 4
    %1102 = vrot.lane.b32.xlu0 %v1101, 64
    %v1103 = vpop.permute.xlu0 %1102
    %v1104 = vsel %vm259, %v1103, 0
    %1106 = vmatprep.subr.mxu0 %v344
    %1107 = vmatpush1.msra.mxu0 %v343
    %1108 = vmatprep.subr.mxu0 %v346
    %1109 = vmatpush1.msra.mxu0 %v345
    %1110 = vmatprep.subr.mxu0 %v348
    %1111 = vmatpush1.msra.mxu0 %v347
    %1112 = vmatprep.subr.mxu0 %v350
    %1113 = vmatpush1.msra.mxu0 %v349
    %1114 = vmatprep.subr.mxu0 %v352
    %1115 = vmatpush1.msra.mxu0 %v351
    %1116 = vmatprep.subr.mxu0 %v354
    %1117 = vmatpush1.msra.mxu0 %v353
    %1118 = vmatprep.subr.mxu0 %v356
    %1119 = vmatpush1.msra.mxu0 %v355
    %1120 = vmatprep.subr.mxu0 %v358
    %1121 = vmatpush1.msra.mxu0 %v357
    %1122 = vmatprep.subr.mxu0 0.0
    %1123 = vmatpush1.msra.mxu0 0.0
    %1124 = vmatprep.subr.mxu0 0.0
    %1125 = vmatpush1.msra.mxu0 0.0
    %1126 = vmatprep.subr.mxu0 0.0
    %1127 = vmatpush1.msra.mxu0 0.0
    %1128 = vmatprep.subr.mxu0 0.0
    %1129 = vmatpush1.msra.mxu0 0.0
    %1130 = vmatprep.subr.mxu0 0.0
    %1131 = vmatpush1.msra.mxu0 0.0
    %1132 = vmatprep.subr.mxu0 0.0
    %1133 = vmatpush1.msra.mxu0 0.0
    %1134 = vmatprep.subr.mxu0 0.0
    %1135 = vmatpush1.msra.mxu0 0.0
    %1136 = vmatprep.subr.mxu0 0.0
    %1137 = vmatpush1.msra.mxu0 0.0
    %1138 = vmatprep.subr.mxu0 0.0
    %1139 = vmatpush1.msra.mxu0 0.0
    %1140 = vmatprep.subr.mxu0 0.0
    %1141 = vmatpush1.msra.mxu0 0.0
    %1142 = vmatprep.subr.mxu0 0.0
    %1143 = vmatpush1.msra.mxu0 0.0
    %1144 = vmatprep.subr.mxu0 0.0
    %1145 = vmatpush1.msra.mxu0 0.0
    %1146 = vmatprep.subr.mxu0 0.0
    %1147 = vmatpush1.msra.mxu0 0.0
    %1148 = vmatprep.subr.mxu0 0.0
    %1149 = vmatpush1.msra.mxu0 0.0
    %1150 = vmatprep.subr.mxu0 0.0
    %1151 = vmatpush1.msra.mxu0 0.0
    %1152 = vmatprep.subr.mxu0 0.0
    %1153 = vmatpush1.msra.mxu0 0.0
    %1154 = vmatprep.subr.mxu0 0.0
    %1155 = vmatpush1.msra.mxu0 0.0
    %1156 = vmatprep.subr.mxu0 0.0
    %1157 = vmatpush1.msra.mxu0 0.0
    %1158 = vmatprep.subr.mxu0 0.0
    %1159 = vmatpush1.msra.mxu0 0.0
    %1160 = vmatprep.subr.mxu0 0.0
    %1161 = vmatpush1.msra.mxu0 0.0
    %1162 = vmatprep.subr.mxu0 0.0
    %1163 = vmatpush1.msra.mxu0 0.0
    %1164 = vmatprep.subr.mxu0 0.0
    %1165 = vmatpush1.msra.mxu0 0.0
    %1166 = vmatprep.subr.mxu0 0.0
    %1167 = vmatpush1.msra.mxu0 0.0
    %1168 = vmatprep.subr.mxu0 0.0
    %1169 = vmatpush1.msra.mxu0 0.0
    %1170 = vmatprep.mubr.f32.mxu0 0.0
    %1171 = vmatmul.mubr.f32.gmra.mrb[0].mxu0 %v1104
    %v1172 = vpop.f32.mrb[0].mxu0
    %v1173 = vadd.f32 %v364, %v1172
    %v1174 = vpop.f32.mrb[0].mxu0
    %v1175 = vadd.f32 %v368, %v1174
    %1176 = vdwg.mxu0
    %v1178 = vrot.slane %v1173, 2
    %v1180 = vadd.f32 %v339, %v1178
    %v1181 = vxor.u32 %v1180, 2147483648
    %v1182 = vmul.f32 %v1181, 1.442695
    %v1183 = vpow.pop %v1182
    %v1184 = vadd.f32 %v1183, 1.0
    %v1185 = vrcp.pop %v1184
    %v1186 = vmul.f32 1.0, %v1185
    %v1188 = vrot.slane %v1175, 2
    %v1190 = vmul.f32 %v1186, %v1188
    %v1191 = vadd.f32 %v341, %v1190
    %v1192 = vtanh.pop %v1191
    %v1193 = vsub.f32 1.0, %v1186
    %1195 = vrot.lane.b32.xlu0 %v1192, 64
    %v1196 = vpop.permute.xlu0 %1195
    %v1198 = vmul.f32 %v1193, %v1196
    %v1199 = vrot.slane %v1095, 6
    %v1201 = vmul.f32 %v1186, %v1199
    %v1202 = vadd.f32 %v1198, %v1201
    %1204 = vrot.lane.b32.xlu0 %v1202, 64
    %v1205 = vpop.permute.xlu0 %1204
    %1207 = vst.msk [vmem:[#allocation2 + $0x8] sm:$0xc0] %vm788, %v1205
    %v1208 = vld [vmem:[#allocation2] sm:$0xff]
    %v1209 = vld [vmem:[#allocation2 + $0x8] sm:$0xff]
    %v1210 = vld [vmem:[%s8] sm:$0xff]
    %v1211 = vld [vmem:[%s8 + $0x8] sm:$0xff]
    %v1212 = vld [vmem:[%s8 + $0x10] sm:$0xff]
    %v1213 = vld [vmem:[%s8 + $0x18] sm:$0xff]
    %v1214 = vld [vmem:[%s8 + $0x20] sm:$0xff]
    %v1215 = vld [vmem:[%s8 + $0x28] sm:$0xff]
    %v1216 = vld [vmem:[%s8 + $0x30] sm:$0xff]
    %v1217 = vld [vmem:[%s8 + $0x38] sm:$0xff]
    %v1218 = vld [vmem:[#allocation14] sm:$0x1]
    %v1220 = vlaneseq
    %v1221 = vshrl.u32 %v1220, 7
    %v1222 = vsub.s32 0, %v1221
    %v1223 = vrot.slane %v1218, %v1222
    %v1226 = vsel %vm259, %v1208, 0
    %v1229 = vsel %vm259, %v1209, 0
    %1231 = vmatprep.subr.mxu0 0.0
    %1232 = vmatpush1.msra.mxu0 %v1210
    %1233 = vmatprep.subr.mxu0 0.0
    %1234 = vmatpush1.msra.mxu0 %v1211
    %1235 = vmatprep.subr.mxu0 0.0
    %1236 = vmatpush1.msra.mxu0 %v1212
    %1237 = vmatprep.subr.mxu0 0.0
    %1238 = vmatpush1.msra.mxu0 %v1213
    %1239 = vmatprep.subr.mxu0 0.0
    %1240 = vmatpush1.msra.mxu0 %v1214
    %1241 = vmatprep.subr.mxu0 0.0
    %1242 = vmatpush1.msra.mxu0 %v1215
    %1243 = vmatprep.subr.mxu0 0.0
    %1244 = vmatpush1.msra.mxu0 %v1216
    %1245 = vmatprep.subr.mxu0 0.0
    %1246 = vmatpush1.msra.mxu0 %v1217
    %1247 = vmatprep.subr.mxu0 0.0
    %1248 = vmatpush1.msra.mxu0 0.0
    %1249 = vmatprep.subr.mxu0 0.0
    %1250 = vmatpush1.msra.mxu0 0.0
    %1251 = vmatprep.subr.mxu0 0.0
    %1252 = vmatpush1.msra.mxu0 0.0
    %1253 = vmatprep.subr.mxu0 0.0
    %1254 = vmatpush1.msra.mxu0 0.0
    %1255 = vmatprep.subr.mxu0 0.0
    %1256 = vmatpush1.msra.mxu0 0.0
    %1257 = vmatprep.subr.mxu0 0.0
    %1258 = vmatpush1.msra.mxu0 0.0
    %1259 = vmatprep.subr.mxu0 0.0
    %1260 = vmatpush1.msra.mxu0 0.0
    %1261 = vmatprep.subr.mxu0 0.0
    %1262 = vmatpush1.msra.mxu0 0.0
    %1263 = vmatprep.subr.mxu0 0.0
    %1264 = vmatpush1.msra.mxu0 0.0
    %1265 = vmatprep.subr.mxu0 0.0
    %1266 = vmatpush1.msra.mxu0 0.0
    %1267 = vmatprep.subr.mxu0 0.0
    %1268 = vmatpush1.msra.mxu0 0.0
    %1269 = vmatprep.subr.mxu0 0.0
    %1270 = vmatpush1.msra.mxu0 0.0
    %1271 = vmatprep.subr.mxu0 0.0
    %1272 = vmatpush1.msra.mxu0 0.0
    %1273 = vmatprep.subr.mxu0 0.0
    %1274 = vmatpush1.msra.mxu0 0.0
    %1275 = vmatprep.subr.mxu0 0.0
    %1276 = vmatpush1.msra.mxu0 0.0
    %1277 = vmatprep.subr.mxu0 0.0
    %1278 = vmatpush1.msra.mxu0 0.0
    %1279 = vmatprep.subr.mxu0 0.0
    %1280 = vmatpush1.msra.mxu0 0.0
    %1281 = vmatprep.subr.mxu0 0.0
    %1282 = vmatpush1.msra.mxu0 0.0
    %1283 = vmatprep.subr.mxu0 0.0
    %1284 = vmatpush1.msra.mxu0 0.0
    %1285 = vmatprep.subr.mxu0 0.0
    %1286 = vmatpush1.msra.mxu0 0.0
    %1287 = vmatprep.subr.mxu0 0.0
    %1288 = vmatpush1.msra.mxu0 0.0
    %1289 = vmatprep.subr.mxu0 0.0
    %1290 = vmatpush1.msra.mxu0 0.0
    %1291 = vmatprep.subr.mxu0 0.0
    %1292 = vmatpush1.msra.mxu0 0.0
    %1293 = vmatprep.subr.mxu0 0.0
    %1294 = vmatpush1.msra.mxu0 0.0
    %1295 = vmatprep.mubr.f32.mxu0 0.0
    %1296 = vmatmul.mubr.f32.gmra.mrb[0].mxu0 %v1226
    %v1297 = vpop.f32.mrb[0].mxu0
    %v1298 = vadd.f32 %v1223, %v1297
    %v1299 = vpop.f32.mrb[0].mxu0
    %1300 = vmatprep.mubr.f32.mxu0 0.0
    %1301 = vmatmul.mubr.f32.gmra.mrb[0].mxu0 %v1229
    %v1302 = vpop.f32.mrb[0].mxu0
    %v1303 = vadd.f32 %v1223, %v1302
    %v1304 = vpop.f32.mrb[0].mxu0
    %1305 = vdwg.mxu0
    %v1306 = vld [vmem:[#allocation6] sm:$0xff]
    %v1307 = vld [vmem:[#allocation6 + $0x8] sm:$0xff]
    %v1309 = vrot.slane %v1298, 2
    %v1311 = vmax.f32 %v1298, %v1309
    %v1312 = vrot.slane %v1298, 4
    %v1314 = vmax.f32 %v1311, %v1312
    %v1315 = vrot.slane %v1298, 6
    %v1317 = vmax.f32 %v1314, %v1315
    %v1318 = vmax.f32 %v1317, %v1303
    %v1320 = vrot.slane %v1303, 2
    %v1322 = vmax.f32 %v1318, %v1320
    %v1323 = vrot.slane %v1303, 4
    %v1325 = vmax.f32 %v1322, %v1323
    %v1326 = vrot.slane %v1303, 6
    %v1328 = vmax.f32 %v1325, %v1326
    %v1330 = vrot.slane %v1328, 6
    %v1332 = vrot.slane %v1328, 4
    %v1334 = vrot.slane %v1328, 2
    %vm1336 = vcmask 1041408
    %v1337 = vsel %vm1336, %v1328, %v1330
    %vm1338 = vcmask 1043456
    %v1339 = vsel %vm1338, %v1337, %v1332
    %vm1340 = vcmask 1045504
    %v1341 = vsel %vm1340, %v1339, %v1334
    %v1342 = vsub.f32 %v1298, %v1341
    %v1343 = vsub.f32 %v1303, %v1341
    %v1344 = vmul.f32 %v1342, 1.442695
    %v1345 = vpow.pop %v1344
    %v1346 = vmul.f32 %v1343, 1.442695
    %v1347 = vpow.pop %v1346
    %v1348 = vmul.f32 %v1345, %v1306
    %v1349 = vmul.f32 %v1347, %v1307
    %v1350 = vmul.f32 %v1208, %v1306
    %v1351 = vmul.f32 %v1209, %v1307
    %v1353 = vrot.slane %v1345, 2
    %v1355 = vadd.f32 %v1345, %v1353
    %v1357 = vrot.slane %v1348, 2
    %v1359 = vadd.f32 %v1348, %v1357
    %v1361 = vrot.slane %v1350, 2
    %v1363 = vadd.f32 %v1350, %v1361
    %v1364 = vrot.slane %v1345, 4
    %v1366 = vadd.f32 %v1355, %v1364
    %v1367 = vrot.slane %v1348, 4
    %v1369 = vadd.f32 %v1359, %v1367
    %v1370 = vrot.slane %v1350, 4
    %v1372 = vadd.f32 %v1363, %v1370
    %v1373 = vrot.slane %v1345, 6
    %v1375 = vadd.f32 %v1366, %v1373
    %v1376 = vrot.slane %v1348, 6
    %v1378 = vadd.f32 %v1369, %v1376
    %v1379 = vrot.slane %v1350, 6
    %v1381 = vadd.f32 %v1372, %v1379
    %v1382 = vadd.f32 %v1375, %v1347
    %v1383 = vadd.f32 %v1378, %v1349
    %v1384 = vadd.f32 %v1381, %v1351
    %v1386 = vrot.slane %v1347, 2
    %v1388 = vadd.f32 %v1382, %v1386
    %v1390 = vrot.slane %v1349, 2
    %v1392 = vadd.f32 %v1383, %v1390
    %v1394 = vrot.slane %v1351, 2
    %v1396 = vadd.f32 %v1384, %v1394
    %v1397 = vrot.slane %v1347, 4
    %v1399 = vadd.f32 %v1388, %v1397
    %v1400 = vrot.slane %v1349, 4
    %v1402 = vadd.f32 %v1392, %v1400
    %v1403 = vrot.slane %v1351, 4
    %v1405 = vadd.f32 %v1396, %v1403
    %v1406 = vrot.slane %v1347, 6
    %v1408 = vadd.f32 %v1399, %v1406
    %v1409 = vrot.slane %v1349, 6
    %v1411 = vadd.f32 %v1402, %v1409
    %v1412 = vrot.slane %v1351, 6
    %v1414 = vadd.f32 %v1405, %v1412
    %v1415 = vrcp.pop %v1408
    %v1416 = vmul.f32 %v1411, %v1415
    %1418 = vrot.lane.b32.xlu0 %v1414, 64
    %v1419 = vpop.permute.xlu0 %1418
    %v1421 = vsel %vm259, %v1416, %v1419
    %v1422 = vld [vmem:[%s10] sm:$0xff]
    %v1423 = vld [vmem:[%s10 + $0x8] sm:$0xff]
    %v1424 = vld [vmem:[%s10 + $0x10] sm:$0xff]
    %v1425 = vld [vmem:[%s10 + $0x18] sm:$0xff]
    %v1426 = vld [vmem:[%s10 + $0x20] sm:$0xff]
    %v1427 = vld [vmem:[%s10 + $0x28] sm:$0xff]
    %v1428 = vld [vmem:[%s10 + $0x30] sm:$0xff]
    %v1429 = vld [vmem:[%s10 + $0x38] sm:$0xff]
    %v1430 = vld [vmem:[%s10 + $0x40] sm:$0xff]
    %v1431 = vld [vmem:[%s10 + $0x48] sm:$0xff]
    %v1432 = vld [vmem:[%s10 + $0x50] sm:$0xff]
    %v1433 = vld [vmem:[%s10 + $0x58] sm:$0xff]
    %v1434 = vld [vmem:[%s10 + $0x60] sm:$0xff]
    %v1435 = vld [vmem:[%s10 + $0x68] sm:$0xff]
    %v1436 = vld [vmem:[%s10 + $0x70] sm:$0xff]
    %v1437 = vld [vmem:[%s10 + $0x78] sm:$0xff]
    %1438 = vmatprep.subr.mxu0 0.0
    %1439 = vmatpush1.msra.mxu0 %v1422
    %1440 = vmatprep.subr.mxu0 0.0
    %1441 = vmatpush1.msra.mxu0 %v1423
    %1442 = vmatprep.subr.mxu0 0.0
    %1443 = vmatpush1.msra.mxu0 %v1424
    %1444 = vmatprep.subr.mxu0 0.0
    %1445 = vmatpush1.msra.mxu0 %v1425
    %1446 = vmatprep.subr.mxu0 0.0
    %1447 = vmatpush1.msra.mxu0 %v1426
    %1448 = vmatprep.subr.mxu0 0.0
    %1449 = vmatpush1.msra.mxu0 %v1427
    %1450 = vmatprep.subr.mxu0 0.0
    %1451 = vmatpush1.msra.mxu0 %v1428
    %1452 = vmatprep.subr.mxu0 0.0
    %1453 = vmatpush1.msra.mxu0 %v1429
    %1454 = vmatprep.subr.mxu0 0.0
    %1455 = vmatpush1.msra.mxu0 %v1430
    %1456 = vmatprep.subr.mxu0 0.0
    %1457 = vmatpush1.msra.mxu0 %v1431
    %1458 = vmatprep.subr.mxu0 0.0
    %1459 = vmatpush1.msra.mxu0 %v1432
    %1460 = vmatprep.subr.mxu0 0.0
    %1461 = vmatpush1.msra.mxu0 %v1433
    %1462 = vmatprep.subr.mxu0 0.0
    %1463 = vmatpush1.msra.mxu0 %v1434
    %1464 = vmatprep.subr.mxu0 0.0
    %1465 = vmatpush1.msra.mxu0 %v1435
    %1466 = vmatprep.subr.mxu0 0.0
    %1467 = vmatpush1.msra.mxu0 %v1436
    %1468 = vmatprep.subr.mxu0 0.0
    %1469 = vmatpush1.msra.mxu0 %v1437
    %1470 = vmatprep.subr.mxu0 0.0
    %1471 = vmatpush1.msra.mxu0 0.0
    %1472 = vmatprep.subr.mxu0 0.0
    %1473 = vmatpush1.msra.mxu0 0.0
    %1474 = vmatprep.subr.mxu0 0.0
    %1475 = vmatpush1.msra.mxu0 0.0
    %1476 = vmatprep.subr.mxu0 0.0
    %1477 = vmatpush1.msra.mxu0 0.0
    %1478 = vmatprep.subr.mxu0 0.0
    %1479 = vmatpush1.msra.mxu0 0.0
    %1480 = vmatprep.subr.mxu0 0.0
    %1481 = vmatpush1.msra.mxu0 0.0
    %1482 = vmatprep.subr.mxu0 0.0
    %1483 = vmatpush1.msra.mxu0 0.0
    %1484 = vmatprep.subr.mxu0 0.0
    %1485 = vmatpush1.msra.mxu0 0.0
    %1486 = vmatprep.subr.mxu0 0.0
    %1487 = vmatpush1.msra.mxu0 0.0
    %1488 = vmatprep.subr.mxu0 0.0
    %1489 = vmatpush1.msra.mxu0 0.0
    %1490 = vmatprep.subr.mxu0 0.0
    %1491 = vmatpush1.msra.mxu0 0.0
    %1492 = vmatprep.subr.mxu0 0.0
    %1493 = vmatpush1.msra.mxu0 0.0
    %1494 = vmatprep.subr.mxu0 0.0
    %1495 = vmatpush1.msra.mxu0 0.0
    %1496 = vmatprep.subr.mxu0 0.0
    %1497 = vmatpush1.msra.mxu0 0.0
    %1498 = vmatprep.subr.mxu0 0.0
    %1499 = vmatpush1.msra.mxu0 0.0
    %1500 = vmatprep.subr.mxu0 0.0
    %1501 = vmatpush1.msra.mxu0 0.0
    %1502 = vmatprep.mubr.f32.mxu0 0.0
    %1503 = vmatmul.mubr.f32.gmra.mrb[0].mxu0 %v1421
    %v1504 = vpop.f32.mrb[0].mxu0
    %v1505 = vadd.f32 0.0, %v1504
    %v1506 = vpop.f32.mrb[0].mxu0
    %1507 = vdwg.mxu0
    %v1508 = vtanh.pop %v1505
    %v1509 = vld [vmem:[%s11] sm:$0xff]
    %v1510 = vld [vmem:[%s11 + $0x8] sm:$0xff]
    %v1511 = vld [vmem:[%s11 + $0x10] sm:$0xff]
    %v1512 = vld [vmem:[%s11 + $0x18] sm:$0xff]
    %v1513 = vld [vmem:[%s12] sm:$0x1]
    %v1515 = vlaneseq
    %v1516 = vshrl.u32 %v1515, 7
    %v1517 = vsub.s32 0, %v1516
    %v1518 = vrot.slane %v1513, %v1517
    %v1521 = vsel %vm147, %v1508, 0
    %1523 = vmatprep.subr.mxu0 0.0
    %1524 = vmatpush1.msra.mxu0 %v1509
    %1525 = vmatprep.subr.mxu0 0.0
    %1526 = vmatpush1.msra.mxu0 %v1510
    %1527 = vmatprep.subr.mxu0 0.0
    %1528 = vmatpush1.msra.mxu0 %v1511
    %1529 = vmatprep.subr.mxu0 0.0
    %1530 = vmatpush1.msra.mxu0 %v1512
    %1531 = vmatprep.subr.mxu0 0.0
    %1532 = vmatpush1.msra.mxu0 0.0
    %1533 = vmatprep.subr.mxu0 0.0
    %1534 = vmatpush1.msra.mxu0 0.0
    %1535 = vmatprep.subr.mxu0 0.0
    %1536 = vmatpush1.msra.mxu0 0.0
    %1537 = vmatprep.subr.mxu0 0.0
    %1538 = vmatpush1.msra.mxu0 0.0
    %1539 = vmatprep.subr.mxu0 0.0
    %1540 = vmatpush1.msra.mxu0 0.0
    %1541 = vmatprep.subr.mxu0 0.0
    %1542 = vmatpush1.msra.mxu0 0.0
    %1543 = vmatprep.subr.mxu0 0.0
    %1544 = vmatpush1.msra.mxu0 0.0
    %1545 = vmatprep.subr.mxu0 0.0
    %1546 = vmatpush1.msra.mxu0 0.0
    %1547 = vmatprep.subr.mxu0 0.0
    %1548 = vmatpush1.msra.mxu0 0.0
    %1549 = vmatprep.subr.mxu0 0.0
    %1550 = vmatpush1.msra.mxu0 0.0
    %1551 = vmatprep.subr.mxu0 0.0
    %1552 = vmatpush1.msra.mxu0 0.0
    %1553 = vmatprep.subr.mxu0 0.0
    %1554 = vmatpush1.msra.mxu0 0.0
    %1555 = vmatprep.subr.mxu0 0.0
    %1556 = vmatpush1.msra.mxu0 0.0
    %1557 = vmatprep.subr.mxu0 0.0
    %1558 = vmatpush1.msra.mxu0 0.0
    %1559 = vmatprep.subr.mxu0 0.0
    %1560 = vmatpush1.msra.mxu0 0.0
    %1561 = vmatprep.subr.mxu0 0.0
    %1562 = vmatpush1.msra.mxu0 0.0
    %1563 = vmatprep.subr.mxu0 0.0
    %1564 = vmatpush1.msra.mxu0 0.0
    %1565 = vmatprep.subr.mxu0 0.0
    %1566 = vmatpush1.msra.mxu0 0.0
    %1567 = vmatprep.subr.mxu0 0.0
    %1568 = vmatpush1.msra.mxu0 0.0
    %1569 = vmatprep.subr.mxu0 0.0
    %1570 = vmatpush1.msra.mxu0 0.0
    %1571 = vmatprep.subr.mxu0 0.0
    %1572 = vmatpush1.msra.mxu0 0.0
    %1573 = vmatprep.subr.mxu0 0.0
    %1574 = vmatpush1.msra.mxu0 0.0
    %1575 = vmatprep.subr.mxu0 0.0
    %1576 = vmatpush1.msra.mxu0 0.0
    %1577 = vmatprep.subr.mxu0 0.0
    %1578 = vmatpush1.msra.mxu0 0.0
    %1579 = vmatprep.subr.mxu0 0.0
    %1580 = vmatpush1.msra.mxu0 0.0
    %1581 = vmatprep.subr.mxu0 0.0
    %1582 = vmatpush1.msra.mxu0 0.0
    %1583 = vmatprep.subr.mxu0 0.0
    %1584 = vmatpush1.msra.mxu0 0.0
    %1585 = vmatprep.subr.mxu0 0.0
    %1586 = vmatpush1.msra.mxu0 0.0
    %1587 = vmatprep.mubr.f32.mxu0 0.0
    %1588 = vmatmul.mubr.f32.gmra.mrb[0].mxu0 %v1521
    %v1589 = vpop.f32.mrb[0].mxu0
    %v1590 = vadd.f32 %v1518, %v1589
    %v1591 = vpop.f32.mrb[0].mxu0
    %1592 = vdwg.mxu0
    %v1593 = vxor.u32 %v1590, 2147483648
    %v1594 = vmul.f32 %v1593, 1.442695
    %v1595 = vpow.pop %v1594
    %v1596 = vadd.f32 %v1595, 1.0
    %v1597 = vrcp.pop %v1596
    %v1598 = vmul.f32 1.0, %v1597
    %vm1599 = vcmask 25600
    %1600 = vst.msk [vmem:[#allocation15] sm:$0x3] %vm1599, %v1598
    // Predicated region
    $region82: #{tpu_custom_call.1} parent=1 // pred_check
      _
    $region83: #{tpu_custom_call.1} parent=1 // pred_check_branch
      %1602 = sbr.rel (0) target = $region85
    $region84: #{tpu_custom_call.1} parent=1 // pred_region
      %s1604 = ssub.s32 32, 32
      %1605 = vsyncadd [#allocation5], %s1604
      %s1607 = sshll.u32 [#allocation15], 4
      %s1608 = int_to_ptr.vmem [resolvable:$true] %s1607
      %1610 = dma.vmem_to_hbm [thread:$0]  %s1608, 32, %s13, [#allocation5]
    $region85: #{tpu_custom_call.1} parent=1 // pred_fallthru
      _
    // Predicated region
    $region86: #{tpu_custom_call.1} parent=1 // pred_check
      _
    $region87: #{tpu_custom_call.1} parent=1 // pred_check_branch
      %1612 = sbr.rel (0) target = $region89
    $region88: #{tpu_custom_call.1} parent=1 // pred_region
      %1613 = dma.done [#allocation5], 32
    $region89: #{tpu_custom_call.1} parent=1 // pred_fallthru
      _
    %1614 = vsyncpa [#allocation4], 1
    %1615 = vsyncpa [#allocation7], 1
    %1616 = vsyncpa [#allocation10], 1
    %1617 = vsyncpa [#allocation13], 1
    %1618 = vsyncpa [#allocation5], 1

</llo_original>
